<compile_context>
chip_gen: v6e
topology: v6e:2x2x1
jax: 0.10.0
libtpu: 0.0.40
codegen_flags: <defaults>
</compile_context>

<pallas_src>
import jax
import jax.numpy as jnp
from jax.experimental import pallas as pl
from jax.experimental.pallas import tpu as pltpu

BS = 2
T = 8            # waypoints = pred_len // wp_dilation
IN_DIM = 256     # config.gru_input_size
H = 64           # config.gru_hidden_size
PHYS_DIM = 18
GEAR_LEN = 27
LATENT = 32
GEAR_DIM = 4

# ---------------------------------------------------------------------------
# Static layout of the packed parameter slabs (module-level, shared by packer
# and kernel).
# ---------------------------------------------------------------------------
def _pad8(n):
    return (n + 7) // 8 * 8

# (name, rows=in_features, cols=out_features) of every small Linear weight.
_W_SHAPES = (
    ("enc_w", 2, H),
    ("g1_w", GEAR_LEN, LATENT),
    ("g2_w", LATENT, GEAR_DIM),
    ("p1_wa", PHYS_DIM, 64),
    ("p1_wb", GEAR_DIM, 64),
    ("p2_w", 64, LATENT),
    ("ph1_w", LATENT, H),
    ("ph2_w", H, H),
    ("f1_wa", H, H),
    ("f1_wb", H, H),
    ("f2_w", H, H),
    ("dec_wa", H, 2),
    ("dec_wb", H, 2),
)
_W_OFF = {}
_off = 0
for _name, _r, _c in _W_SHAPES:
    _W_OFF[_name] = (_off, _r, _c)
    _off += _pad8(_r)           # 8-aligned row offsets inside the slab
W_SLAB_ROWS = _off              # 584
W_SLAB_COLS = 64

# One row per bias vector (padded to 192 lanes); row 0 is the folded GRU bias.
_B_ROWS = ("gru_b", "bh_n", "enc_b", "g1_b", "g2_b", "p1_b",
           "p2_b", "ph1_b", "ph2_b", "f1_b", "f2_b", "dec_b")
_B_WIDTH = {"gru_b": 3 * H, "bh_n": H, "enc_b": H, "g1_b": LATENT,
            "g2_b": GEAR_DIM, "p1_b": 64, "p2_b": LATENT, "ph1_b": H,
            "ph2_b": H, "f1_b": H, "f2_b": H, "dec_b": 2}
_B_IDX = {n: i for i, n in enumerate(_B_ROWS)}
B_SLAB_COLS = 3 * H


# ---------------------------------------------------------------------------
# Kernel
# ---------------------------------------------------------------------------
def mvadapt_kernel(x_ref, feat_ref, wih_ref, whh_ref, w_slab_ref, b_slab_ref, out_ref):
    f32 = jnp.float32
    bs = out_ref.shape[0]
    relu = lambda v: jnp.maximum(v, 0.0)
    dot = lambda a, b_: jnp.dot(a, b_, preferred_element_type=f32)

    def w(name):
        off, r, c = _W_OFF[name]
        return w_slab_ref[pl.ds(off, r), pl.ds(0, c)]

    def b(name):
        return b_slab_ref[pl.ds(_B_IDX[name], 1), pl.ds(0, _B_WIDTH[name])]

    feat = feat_ref[...]                                  # (bs, 47) = [tp | physics | gear]
    tp = feat[:, 0:2]
    phys = feat[:, 2:2 + PHYS_DIM]
    gear = feat[:, 2 + PHYS_DIM:2 + PHYS_DIM + GEAR_LEN]

    # ForwardGearEncoder: Linear(27->32) -> (Dropout) -> ReLU -> Linear(32->4) -> (Dropout)
    gear_latent = dot(relu(dot(gear, w("g1_w")) + b("g1_b")), w("g2_w")) + b("g2_b")   # (bs, 4)

    # PhysicsEncoder.encoder on concat([physics, gear_latent]) (concat split into 2 matmuls)
    h1 = relu(dot(phys, w("p1_wa")) + dot(gear_latent, w("p1_wb")) + b("p1_b"))
    phys_lat = dot(h1, w("p2_w")) + b("p2_b")                                          # (bs, 32)

    # physics_hidden: Linear(32->H) -> ReLU -> Linear(H->H)
    ph = relu(dot(phys_lat, w("ph1_w")) + b("ph1_b"))
    physics_latent = dot(ph, w("ph2_w")) + b("ph2_b")                                  # (bs, H)

    # self.encoder(target_point): Linear(2->H)
    tp_enc = dot(tp, w("enc_w")) + b("enc_b")                                          # (bs, H)

    # fusion_encoder on concat([tp_enc, physics_latent]): Linear(2H->H) -> ReLU -> Linear(H->H)
    f1 = relu(dot(tp_enc, w("f1_wa")) + dot(physics_latent, w("f1_wb")) + b("f1_b"))
    h = dot(f1, w("f2_w")) + b("f2_b")                                                 # (bs, H) = h_0

    # ---- GRU ---------------------------------------------------------------
    # Input projection for ALL timesteps at once (no sequential dependency):
    #   xW = x @ [W_ir|W_iz|W_in] + [bi_r+bh_r | bi_z+bh_z | bi_n]
    xW = dot(x_ref[...], wih_ref[...]) + b("gru_b")                                    # (T*bs, 3H) f32
    whh = whh_ref[...]                                    # (H, 3H) bf16, loop-invariant
    bh_n = jnp.broadcast_to(b("bh_n"), (bs, H))           # hoisted broadcast

    hs = []
    for t in range(T):
        xg = xW[t * bs:(t + 1) * bs, :]                   # contiguous (time-major layout)
        hW = dot(h.astype(whh.dtype), whh)                # single packed recurrent matmul
        r = jax.nn.sigmoid(xg[:, 0:H] + hW[:, 0:H])
        z = jax.nn.sigmoid(xg[:, H:2 * H] + hW[:, H:2 * H])
        n = jnp.tanh(xg[:, 2 * H:3 * H] + r * (hW[:, 2 * H:3 * H] + bh_n))
        h = (1.0 - z) * n + z * h                         # (bs, H) f32
        hs.append(h)

    # ---- decoder (batched) + cumsum -----------------------------------------
    h_all = jnp.concatenate(hs, axis=0)                   # (T*bs, H)
    dec_h = dot(h_all, w("dec_wa"))                       # (T*bs, 2): one matmul, not 8
    dec_p = dot(physics_latent, w("dec_wb")) + b("dec_b") # (bs, 2): loop-invariant, once

    acc = jnp.zeros((bs, 2), dtype=f32)
    cols = []
    for t in range(T):
        acc = acc + dec_h[t * bs:(t + 1) * bs, :] + dec_p
        cols.append(acc)
    out_ref[...] = jnp.concatenate(cols, axis=1)          # (bs, T*2): single lane-dense store


# ---------------------------------------------------------------------------
# Parameter init + host-side packing
# ---------------------------------------------------------------------------
def init_params(key):
    """Deterministic PyTorch-style uniform(-1/sqrt(fan_in), +1/sqrt(fan_in)) init,
    packed into 4 kernel operands: (wih bf16, whh bf16, w_slab f32, b_slab f32)."""
    def lin(k, fan_in, fan_out):
        k1, k2 = jax.random.split(k)
        bound = 1.0 / (fan_in ** 0.5)
        wgt = jax.random.uniform(k1, (fan_in, fan_out), jnp.float32, -bound, bound)
        bias = jax.random.uniform(k2, (1, fan_out), jnp.float32, -bound, bound)
        return wgt, bias

    keys = jax.random.split(key, 12)
    enc_w, enc_b = lin(keys[0], 2, H)
    g1_w, g1_b = lin(keys[1], GEAR_LEN, LATENT)
    g2_w, g2_b = lin(keys[2], LATENT, GEAR_DIM)
    p1_w, p1_b = lin(keys[3], PHYS_DIM + GEAR_DIM, 64)
    p2_w, p2_b = lin(keys[4], 64, LATENT)
    ph1_w, ph1_b = lin(keys[5], LATENT, H)
    ph2_w, ph2_b = lin(keys[6], H, H)
    f1_w, f1_b = lin(keys[7], 2 * H, H)
    f2_w, f2_b = lin(keys[8], H, H)
    dec_w, dec_b = lin(keys[10], 2 * H, 2)

    # GRU (PyTorch layout: gate chunks [r, z, n], init uniform(-1/sqrt(H), 1/sqrt(H))),
    # stored transposed and gate-packed along the output dim.
    gb = 1.0 / (H ** 0.5)
    gk = jax.random.split(keys[9], 12)
    wih = jnp.concatenate(
        [jax.random.uniform(gk[i], (IN_DIM, H), jnp.float32, -gb, gb) for i in range(3)], axis=1)
    whh = jnp.concatenate(
        [jax.random.uniform(gk[3 + i], (H, H), jnp.float32, -gb, gb) for i in range(3)], axis=1)
    bi_r, bi_z, bi_n = (jax.random.uniform(gk[6 + i], (1, H), jnp.float32, -gb, gb)
                        for i in range(3))
    bh_r, bh_z, bh_n = (jax.random.uniform(gk[9 + i], (1, H), jnp.float32, -gb, gb)
                        for i in range(3))
    # Fold r/z bias pairs; the n biases must stay separate (bh_n is gated by r).
    gru_b = jnp.concatenate([bi_r + bh_r, bi_z + bh_z, bi_n], axis=1)   # (1, 3H)

    named_w = {
        "enc_w": enc_w, "g1_w": g1_w, "g2_w": g2_w,
        "p1_wa": p1_w[:PHYS_DIM], "p1_wb": p1_w[PHYS_DIM:],
        "p2_w": p2_w, "ph1_w": ph1_w, "ph2_w": ph2_w,
        "f1_wa": f1_w[:H], "f1_wb": f1_w[H:], "f2_w": f2_w,
        "dec_wa": dec_w[:H], "dec_wb": dec_w[H:],
    }
    w_slab = jnp.zeros((W_SLAB_ROWS, W_SLAB_COLS), jnp.float32)
    for name, (off, r, c) in _W_OFF.items():
        w_slab = w_slab.at[off:off + r, :c].set(named_w[name])

    named_b = {
        "gru_b": gru_b, "bh_n": bh_n, "enc_b": enc_b, "g1_b": g1_b, "g2_b": g2_b,
        "p1_b": p1_b, "p2_b": p2_b, "ph1_b": ph1_b, "ph2_b": ph2_b,
        "f1_b": f1_b, "f2_b": f2_b, "dec_b": dec_b,
    }
    b_slab = jnp.zeros((len(_B_ROWS), B_SLAB_COLS), jnp.float32)
    for name, i in _B_IDX.items():
        b_slab = b_slab.at[i:i + 1, :_B_WIDTH[name]].set(named_b[name])

    # bf16 operands for the two big GRU matmuls (kernel accumulates in f32).
    return (wih.astype(jnp.bfloat16), whh.astype(jnp.bfloat16), w_slab, b_slab)


# ---------------------------------------------------------------------------
# Wrapper
# ---------------------------------------------------------------------------
def mvadapt_forward(x, target_point, physics_params, gear_params, params):
    wih, whh, w_slab, b_slab = params
    # mirror torch: x.reshape(-1, 8, 256) when last dim != 2
    if x.shape[-1] != 2:
        x = x.reshape(-1, T, IN_DIM)
    bs = x.shape[0]
    # Layout plumbing (no compute hoisted): time-major flatten so the per-step
    # slices of the in-kernel input projection are contiguous; bf16 halves the
    # x DMA and feeds the MXU natively on v6e/v7x.
    x_flat = jnp.transpose(x, (1, 0, 2)).reshape(bs * T, IN_DIM).astype(jnp.bfloat16)
    feat = jnp.concatenate(
        [target_point.astype(jnp.float32),
         physics_params.astype(jnp.float32),
         gear_params.astype(jnp.float32)], axis=1)                  # (bs, 47)

    out = pl.pallas_call(
        mvadapt_kernel,
        out_shape=jax.ShapeDtypeStruct((bs, T * 2), jnp.float32),
        in_specs=[pl.BlockSpec(memory_space=pltpu.MemorySpace.VMEM)] * 6,
        out_specs=pl.BlockSpec(memory_space=pltpu.MemorySpace.VMEM),
    )(x_flat, feat, wih, whh, w_slab, b_slab)
    # TODO(synk): if batch size ever grows well beyond 2, add a grid over batch with
    # dimension_semantics=("parallel",) so the work shards across v7x's two TensorCores.
    return out


if __name__ == "__main__":
    key = jax.random.PRNGKey(0)
    kp, kx, kt, kph, kg = jax.random.split(key, 5)

    params = init_params(kp)

    # joined_wp_features comes in flat (bs, 8*256); forward reshapes it to (-1, 8, 256)
    x = jax.random.normal(kx, (BS, T * IN_DIM), dtype=jnp.float32)
    target_point = jax.random.normal(kt, (BS, 2), dtype=jnp.float32)
    physics_params = jax.random.normal(kph, (BS, PHYS_DIM), dtype=jnp.float32)
    gear_params = jax.random.normal(kg, (BS, GEAR_LEN), dtype=jnp.float32)

    out = mvadapt_forward(x, target_point, physics_params, gear_params, params)
    out = jax.block_until_ready(out)
    assert out.shape == (BS, T * 2), out.shape
    print("KERNEL_OK")
</pallas_src>

<mosaic_0001>
module attributes {stable_mosaic.version = 11 : i64} {
  func.func @mvadapt_kernel(%arg0: memref<16x256xbf16, #tpu.memory_space<vmem>>, %arg1: memref<2x47xf32, #tpu.memory_space<vmem>>, %arg2: memref<256x192xbf16, #tpu.memory_space<vmem>>, %arg3: memref<64x192xbf16, #tpu.memory_space<vmem>>, %arg4: memref<584x64xf32, #tpu.memory_space<vmem>>, %arg5: memref<12x192xf32, #tpu.memory_space<vmem>>, %arg6: memref<2x16xf32, #tpu.memory_space<vmem>>) attributes {dimension_semantics = [], scalar_prefetch = 0 : i64, scratch_operands = 0 : i64, tpu.core_type = #tpu.core_type<tc>} {
    %c0 = arith.constant 0 : index
    %c0_0 = arith.constant 0 : index
    %0 = vector.load %arg1[%c0, %c0_0] : memref<2x47xf32, #tpu.memory_space<vmem>>, vector<2x47xf32>
    %1 = vector.extract_strided_slice %0 {offsets = [0, 0], sizes = [2, 2], strides = [1, 1]} : vector<2x47xf32> to vector<2x2xf32>
    %2 = vector.extract_strided_slice %0 {offsets = [0, 2], sizes = [2, 18], strides = [1, 1]} : vector<2x47xf32> to vector<2x18xf32>
    %3 = vector.extract_strided_slice %0 {offsets = [0, 20], sizes = [2, 27], strides = [1, 1]} : vector<2x47xf32> to vector<2x27xf32>
    %c8 = arith.constant 8 : index
    %c0_1 = arith.constant 0 : index
    %4 = vector.load %arg4[%c8, %c0_1] : memref<584x64xf32, #tpu.memory_space<vmem>>, vector<27x32xf32>
    %cst = arith.constant dense<0.000000e+00> : vector<2x32xf32>
    %5 = tpu.matmul %3, %4, %cst {dimension_numbers = #tpu.dot_dimension_numbers<[1], [0], [0], [1], [0, 0, 1, 1], [], []>} : vector<2x27xf32>, vector<27x32xf32>, vector<2x32xf32> -> vector<2x32xf32>
    %c3 = arith.constant 3 : index
    %c0_2 = arith.constant 0 : index
    %6 = vector.load %arg5[%c3, %c0_2] : memref<12x192xf32, #tpu.memory_space<vmem>>, vector<1x32xf32>
    %7 = vector.broadcast %6 : vector<1x32xf32> to vector<2x32xf32>
    %8 = arith.addf %5, %7 : vector<2x32xf32>
    %cst_3 = arith.constant 0.000000e+00 : f32
    %9 = vector.broadcast %cst_3 : f32 to vector<2x32xf32>
    %10 = arith.maximumf %8, %9 : vector<2x32xf32>
    %c40 = arith.constant 40 : index
    %c0_4 = arith.constant 0 : index
    %11 = vector.load %arg4[%c40, %c0_4] : memref<584x64xf32, #tpu.memory_space<vmem>>, vector<32x4xf32>
    %cst_5 = arith.constant dense<0.000000e+00> : vector<2x4xf32>
    %12 = tpu.matmul %10, %11, %cst_5 {dimension_numbers = #tpu.dot_dimension_numbers<[1], [0], [0], [1], [0, 0, 1, 1], [], []>} : vector<2x32xf32>, vector<32x4xf32>, vector<2x4xf32> -> vector<2x4xf32>
    %c4 = arith.constant 4 : index
    %c0_6 = arith.constant 0 : index
    %13 = vector.load %arg5[%c4, %c0_6] : memref<12x192xf32, #tpu.memory_space<vmem>>, vector<1x4xf32>
    %14 = vector.broadcast %13 : vector<1x4xf32> to vector<2x4xf32>
    %15 = arith.addf %12, %14 : vector<2x4xf32>
    %c72 = arith.constant 72 : index
    %c0_7 = arith.constant 0 : index
    %16 = vector.load %arg4[%c72, %c0_7] : memref<584x64xf32, #tpu.memory_space<vmem>>, vector<18x64xf32>
    %cst_8 = arith.constant dense<0.000000e+00> : vector<2x64xf32>
    %17 = tpu.matmul %2, %16, %cst_8 {dimension_numbers = #tpu.dot_dimension_numbers<[1], [0], [0], [1], [0, 0, 1, 1], [], []>} : vector<2x18xf32>, vector<18x64xf32>, vector<2x64xf32> -> vector<2x64xf32>
    %c96 = arith.constant 96 : index
    %c0_9 = arith.constant 0 : index
    %18 = vector.load %arg4[%c96, %c0_9] : memref<584x64xf32, #tpu.memory_space<vmem>>, vector<4x64xf32>
    %cst_10 = arith.constant dense<0.000000e+00> : vector<2x64xf32>
    %19 = tpu.matmul %15, %18, %cst_10 {dimension_numbers = #tpu.dot_dimension_numbers<[1], [0], [0], [1], [0, 0, 1, 1], [], []>} : vector<2x4xf32>, vector<4x64xf32>, vector<2x64xf32> -> vector<2x64xf32>
    %20 = arith.addf %17, %19 : vector<2x64xf32>
    %c5 = arith.constant 5 : index
    %c0_11 = arith.constant 0 : index
    %21 = vector.load %arg5[%c5, %c0_11] : memref<12x192xf32, #tpu.memory_space<vmem>>, vector<1x64xf32>
    %22 = vector.broadcast %21 : vector<1x64xf32> to vector<2x64xf32>
    %23 = arith.addf %20, %22 : vector<2x64xf32>
    %cst_12 = arith.constant 0.000000e+00 : f32
    %24 = vector.broadcast %cst_12 : f32 to vector<2x64xf32>
    %25 = arith.maximumf %23, %24 : vector<2x64xf32>
    %c104 = arith.constant 104 : index
    %c0_13 = arith.constant 0 : index
    %26 = vector.load %arg4[%c104, %c0_13] : memref<584x64xf32, #tpu.memory_space<vmem>>, vector<64x32xf32>
    %cst_14 = arith.constant dense<0.000000e+00> : vector<2x32xf32>
    %27 = tpu.matmul %25, %26, %cst_14 {dimension_numbers = #tpu.dot_dimension_numbers<[1], [0], [0], [1], [0, 0, 1, 1], [], []>} : vector<2x64xf32>, vector<64x32xf32>, vector<2x32xf32> -> vector<2x32xf32>
    %c6 = arith.constant 6 : index
    %c0_15 = arith.constant 0 : index
    %28 = vector.load %arg5[%c6, %c0_15] : memref<12x192xf32, #tpu.memory_space<vmem>>, vector<1x32xf32>
    %29 = vector.broadcast %28 : vector<1x32xf32> to vector<2x32xf32>
    %30 = arith.addf %27, %29 : vector<2x32xf32>
    %c168 = arith.constant 168 : index
    %c0_16 = arith.constant 0 : index
    %31 = vector.load %arg4[%c168, %c0_16] : memref<584x64xf32, #tpu.memory_space<vmem>>, vector<32x64xf32>
    %cst_17 = arith.constant dense<0.000000e+00> : vector<2x64xf32>
    %32 = tpu.matmul %30, %31, %cst_17 {dimension_numbers = #tpu.dot_dimension_numbers<[1], [0], [0], [1], [0, 0, 1, 1], [], []>} : vector<2x32xf32>, vector<32x64xf32>, vector<2x64xf32> -> vector<2x64xf32>
    %c7 = arith.constant 7 : index
    %c0_18 = arith.constant 0 : index
    %33 = vector.load %arg5[%c7, %c0_18] : memref<12x192xf32, #tpu.memory_space<vmem>>, vector<1x64xf32>
    %34 = vector.broadcast %33 : vector<1x64xf32> to vector<2x64xf32>
    %35 = arith.addf %32, %34 : vector<2x64xf32>
    %cst_19 = arith.constant 0.000000e+00 : f32
    %36 = vector.broadcast %cst_19 : f32 to vector<2x64xf32>
    %37 = arith.maximumf %35, %36 : vector<2x64xf32>
    %c200 = arith.constant 200 : index
    %c0_20 = arith.constant 0 : index
    %38 = vector.load %arg4[%c200, %c0_20] : memref<584x64xf32, #tpu.memory_space<vmem>>, vector<64x64xf32>
    %cst_21 = arith.constant dense<0.000000e+00> : vector<2x64xf32>
    %39 = tpu.matmul %37, %38, %cst_21 {dimension_numbers = #tpu.dot_dimension_numbers<[1], [0], [0], [1], [0, 0, 1, 1], [], []>} : vector<2x64xf32>, vector<64x64xf32>, vector<2x64xf32> -> vector<2x64xf32>
    %c8_22 = arith.constant 8 : index
    %c0_23 = arith.constant 0 : index
    %40 = vector.load %arg5[%c8_22, %c0_23] : memref<12x192xf32, #tpu.memory_space<vmem>>, vector<1x64xf32>
    %41 = vector.broadcast %40 : vector<1x64xf32> to vector<2x64xf32>
    %42 = arith.addf %39, %41 : vector<2x64xf32>
    %c0_24 = arith.constant 0 : index
    %c0_25 = arith.constant 0 : index
    %43 = vector.load %arg4[%c0_24, %c0_25] : memref<584x64xf32, #tpu.memory_space<vmem>>, vector<2x64xf32>
    %cst_26 = arith.constant dense<0.000000e+00> : vector<2x64xf32>
    %44 = tpu.matmul %1, %43, %cst_26 {dimension_numbers = #tpu.dot_dimension_numbers<[1], [0], [0], [1], [0, 0, 1, 1], [], []>} : vector<2x2xf32>, vector<2x64xf32>, vector<2x64xf32> -> vector<2x64xf32>
    %c2 = arith.constant 2 : index
    %c0_27 = arith.constant 0 : index
    %45 = vector.load %arg5[%c2, %c0_27] : memref<12x192xf32, #tpu.memory_space<vmem>>, vector<1x64xf32>
    %46 = vector.broadcast %45 : vector<1x64xf32> to vector<2x64xf32>
    %47 = arith.addf %44, %46 : vector<2x64xf32>
    %c264 = arith.constant 264 : index
    %c0_28 = arith.constant 0 : index
    %48 = vector.load %arg4[%c264, %c0_28] : memref<584x64xf32, #tpu.memory_space<vmem>>, vector<64x64xf32>
    %cst_29 = arith.constant dense<0.000000e+00> : vector<2x64xf32>
    %49 = tpu.matmul %47, %48, %cst_29 {dimension_numbers = #tpu.dot_dimension_numbers<[1], [0], [0], [1], [0, 0, 1, 1], [], []>} : vector<2x64xf32>, vector<64x64xf32>, vector<2x64xf32> -> vector<2x64xf32>
    %c328 = arith.constant 328 : index
    %c0_30 = arith.constant 0 : index
    %50 = vector.load %arg4[%c328, %c0_30] : memref<584x64xf32, #tpu.memory_space<vmem>>, vector<64x64xf32>
    %cst_31 = arith.constant dense<0.000000e+00> : vector<2x64xf32>
    %51 = tpu.matmul %42, %50, %cst_31 {dimension_numbers = #tpu.dot_dimension_numbers<[1], [0], [0], [1], [0, 0, 1, 1], [], []>} : vector<2x64xf32>, vector<64x64xf32>, vector<2x64xf32> -> vector<2x64xf32>
    %52 = arith.addf %49, %51 : vector<2x64xf32>
    %c9 = arith.constant 9 : index
    %c0_32 = arith.constant 0 : index
    %53 = vector.load %arg5[%c9, %c0_32] : memref<12x192xf32, #tpu.memory_space<vmem>>, vector<1x64xf32>
    %54 = vector.broadcast %53 : vector<1x64xf32> to vector<2x64xf32>
    %55 = arith.addf %52, %54 : vector<2x64xf32>
    %cst_33 = arith.constant 0.000000e+00 : f32
    %56 = vector.broadcast %cst_33 : f32 to vector<2x64xf32>
    %57 = arith.maximumf %55, %56 : vector<2x64xf32>
    %c392 = arith.constant 392 : index
    %c0_34 = arith.constant 0 : index
    %58 = vector.load %arg4[%c392, %c0_34] : memref<584x64xf32, #tpu.memory_space<vmem>>, vector<64x64xf32>
    %cst_35 = arith.constant dense<0.000000e+00> : vector<2x64xf32>
    %59 = tpu.matmul %57, %58, %cst_35 {dimension_numbers = #tpu.dot_dimension_numbers<[1], [0], [0], [1], [0, 0, 1, 1], [], []>} : vector<2x64xf32>, vector<64x64xf32>, vector<2x64xf32> -> vector<2x64xf32>
    %c10 = arith.constant 10 : index
    %c0_36 = arith.constant 0 : index
    %60 = vector.load %arg5[%c10, %c0_36] : memref<12x192xf32, #tpu.memory_space<vmem>>, vector<1x64xf32>
    %61 = vector.broadcast %60 : vector<1x64xf32> to vector<2x64xf32>
    %62 = arith.addf %59, %61 : vector<2x64xf32>
    %c0_37 = arith.constant 0 : index
    %c0_38 = arith.constant 0 : index
    %63 = vector.load %arg0[%c0_37, %c0_38] : memref<16x256xbf16, #tpu.memory_space<vmem>>, vector<16x256xbf16>
    %c0_39 = arith.constant 0 : index
    %c0_40 = arith.constant 0 : index
    %64 = vector.load %arg2[%c0_39, %c0_40] : memref<256x192xbf16, #tpu.memory_space<vmem>>, vector<256x192xbf16>
    %cst_41 = arith.constant dense<0.000000e+00> : vector<16x192xf32>
    %65 = tpu.matmul %63, %64, %cst_41 {dimension_numbers = #tpu.dot_dimension_numbers<[1], [0], [0], [1], [0, 0, 1, 1], [], []>} : vector<16x256xbf16>, vector<256x192xbf16>, vector<16x192xf32> -> vector<16x192xf32>
    %c0_42 = arith.constant 0 : index
    %c0_43 = arith.constant 0 : index
    %66 = vector.load %arg5[%c0_42, %c0_43] : memref<12x192xf32, #tpu.memory_space<vmem>>, vector<1x192xf32>
    %67 = vector.broadcast %66 : vector<1x192xf32> to vector<16x192xf32>
    %68 = arith.addf %65, %67 : vector<16x192xf32>
    %c0_44 = arith.constant 0 : index
    %c0_45 = arith.constant 0 : index
    %69 = vector.load %arg3[%c0_44, %c0_45] : memref<64x192xbf16, #tpu.memory_space<vmem>>, vector<64x192xbf16>
    %c1 = arith.constant 1 : index
    %c0_46 = arith.constant 0 : index
    %70 = vector.load %arg5[%c1, %c0_46] : memref<12x192xf32, #tpu.memory_space<vmem>>, vector<1x64xf32>
    %71 = vector.shape_cast %70 : vector<1x64xf32> to vector<1x64xf32>
    %72 = vector.broadcast %71 : vector<1x64xf32> to vector<2x64xf32>
    %73 = vector.extract_strided_slice %68 {offsets = [0, 0], sizes = [2, 192], strides = [1, 1]} : vector<16x192xf32> to vector<2x192xf32>
    %74 = arith.truncf %62 : vector<2x64xf32> to vector<2x64xbf16>
    %cst_47 = arith.constant dense<0.000000e+00> : vector<2x192xf32>
    %75 = tpu.matmul %74, %69, %cst_47 {dimension_numbers = #tpu.dot_dimension_numbers<[1], [0], [0], [1], [0, 0, 1, 1], [], []>} : vector<2x64xbf16>, vector<64x192xbf16>, vector<2x192xf32> -> vector<2x192xf32>
    %76 = vector.extract_strided_slice %73 {offsets = [0, 0], sizes = [2, 64], strides = [1, 1]} : vector<2x192xf32> to vector<2x64xf32>
    %77 = vector.extract_strided_slice %75 {offsets = [0, 0], sizes = [2, 64], strides = [1, 1]} : vector<2x192xf32> to vector<2x64xf32>
    %78 = arith.addf %76, %77 : vector<2x64xf32>
    %79 = arith.negf %78 : vector<2x64xf32>
    %80 = math.exp %79 : vector<2x64xf32>
    %cst_48 = arith.constant 1.000000e+00 : f32
    %81 = vector.broadcast %cst_48 : f32 to vector<2x64xf32>
    %82 = arith.addf %81, %80 : vector<2x64xf32>
    %83 = arith.divf %81, %82 : vector<2x64xf32>
    %84 = vector.extract_strided_slice %73 {offsets = [0, 64], sizes = [2, 64], strides = [1, 1]} : vector<2x192xf32> to vector<2x64xf32>
    %85 = vector.extract_strided_slice %75 {offsets = [0, 64], sizes = [2, 64], strides = [1, 1]} : vector<2x192xf32> to vector<2x64xf32>
    %86 = arith.addf %84, %85 : vector<2x64xf32>
    %87 = arith.negf %86 : vector<2x64xf32>
    %88 = math.exp %87 : vector<2x64xf32>
    %cst_49 = arith.constant 1.000000e+00 : f32
    %89 = vector.broadcast %cst_49 : f32 to vector<2x64xf32>
    %90 = arith.addf %89, %88 : vector<2x64xf32>
    %91 = arith.divf %89, %90 : vector<2x64xf32>
    %92 = vector.extract_strided_slice %73 {offsets = [0, 128], sizes = [2, 64], strides = [1, 1]} : vector<2x192xf32> to vector<2x64xf32>
    %93 = vector.extract_strided_slice %75 {offsets = [0, 128], sizes = [2, 64], strides = [1, 1]} : vector<2x192xf32> to vector<2x64xf32>
    %94 = arith.addf %93, %72 : vector<2x64xf32>
    %95 = arith.mulf %83, %94 : vector<2x64xf32>
    %96 = arith.addf %92, %95 : vector<2x64xf32>
    %97 = math.tanh %96 : vector<2x64xf32>
    %cst_50 = arith.constant 1.000000e+00 : f32
    %98 = vector.broadcast %cst_50 : f32 to vector<2x64xf32>
    %99 = arith.subf %98, %91 : vector<2x64xf32>
    %100 = arith.mulf %99, %97 : vector<2x64xf32>
    %101 = arith.mulf %91, %62 : vector<2x64xf32>
    %102 = arith.addf %100, %101 : vector<2x64xf32>
    %103 = vector.extract_strided_slice %68 {offsets = [2, 0], sizes = [2, 192], strides = [1, 1]} : vector<16x192xf32> to vector<2x192xf32>
    %104 = arith.truncf %102 : vector<2x64xf32> to vector<2x64xbf16>
    %cst_51 = arith.constant dense<0.000000e+00> : vector<2x192xf32>
    %105 = tpu.matmul %104, %69, %cst_51 {dimension_numbers = #tpu.dot_dimension_numbers<[1], [0], [0], [1], [0, 0, 1, 1], [], []>} : vector<2x64xbf16>, vector<64x192xbf16>, vector<2x192xf32> -> vector<2x192xf32>
    %106 = vector.extract_strided_slice %103 {offsets = [0, 0], sizes = [2, 64], strides = [1, 1]} : vector<2x192xf32> to vector<2x64xf32>
    %107 = vector.extract_strided_slice %105 {offsets = [0, 0], sizes = [2, 64], strides = [1, 1]} : vector<2x192xf32> to vector<2x64xf32>
    %108 = arith.addf %106, %107 : vector<2x64xf32>
    %109 = arith.negf %108 : vector<2x64xf32>
    %110 = math.exp %109 : vector<2x64xf32>
    %cst_52 = arith.constant 1.000000e+00 : f32
    %111 = vector.broadcast %cst_52 : f32 to vector<2x64xf32>
    %112 = arith.addf %111, %110 : vector<2x64xf32>
    %113 = arith.divf %111, %112 : vector<2x64xf32>
    %114 = vector.extract_strided_slice %103 {offsets = [0, 64], sizes = [2, 64], strides = [1, 1]} : vector<2x192xf32> to vector<2x64xf32>
    %115 = vector.extract_strided_slice %105 {offsets = [0, 64], sizes = [2, 64], strides = [1, 1]} : vector<2x192xf32> to vector<2x64xf32>
    %116 = arith.addf %114, %115 : vector<2x64xf32>
    %117 = arith.negf %116 : vector<2x64xf32>
    %118 = math.exp %117 : vector<2x64xf32>
    %cst_53 = arith.constant 1.000000e+00 : f32
    %119 = vector.broadcast %cst_53 : f32 to vector<2x64xf32>
    %120 = arith.addf %119, %118 : vector<2x64xf32>
    %121 = arith.divf %119, %120 : vector<2x64xf32>
    %122 = vector.extract_strided_slice %103 {offsets = [0, 128], sizes = [2, 64], strides = [1, 1]} : vector<2x192xf32> to vector<2x64xf32>
    %123 = vector.extract_strided_slice %105 {offsets = [0, 128], sizes = [2, 64], strides = [1, 1]} : vector<2x192xf32> to vector<2x64xf32>
    %124 = arith.addf %123, %72 : vector<2x64xf32>
    %125 = arith.mulf %113, %124 : vector<2x64xf32>
    %126 = arith.addf %122, %125 : vector<2x64xf32>
    %127 = math.tanh %126 : vector<2x64xf32>
    %cst_54 = arith.constant 1.000000e+00 : f32
    %128 = vector.broadcast %cst_54 : f32 to vector<2x64xf32>
    %129 = arith.subf %128, %121 : vector<2x64xf32>
    %130 = arith.mulf %129, %127 : vector<2x64xf32>
    %131 = arith.mulf %121, %102 : vector<2x64xf32>
    %132 = arith.addf %130, %131 : vector<2x64xf32>
    %133 = vector.extract_strided_slice %68 {offsets = [4, 0], sizes = [2, 192], strides = [1, 1]} : vector<16x192xf32> to vector<2x192xf32>
    %134 = arith.truncf %132 : vector<2x64xf32> to vector<2x64xbf16>
    %cst_55 = arith.constant dense<0.000000e+00> : vector<2x192xf32>
    %135 = tpu.matmul %134, %69, %cst_55 {dimension_numbers = #tpu.dot_dimension_numbers<[1], [0], [0], [1], [0, 0, 1, 1], [], []>} : vector<2x64xbf16>, vector<64x192xbf16>, vector<2x192xf32> -> vector<2x192xf32>
    %136 = vector.extract_strided_slice %133 {offsets = [0, 0], sizes = [2, 64], strides = [1, 1]} : vector<2x192xf32> to vector<2x64xf32>
    %137 = vector.extract_strided_slice %135 {offsets = [0, 0], sizes = [2, 64], strides = [1, 1]} : vector<2x192xf32> to vector<2x64xf32>
    %138 = arith.addf %136, %137 : vector<2x64xf32>
    %139 = arith.negf %138 : vector<2x64xf32>
    %140 = math.exp %139 : vector<2x64xf32>
    %cst_56 = arith.constant 1.000000e+00 : f32
    %141 = vector.broadcast %cst_56 : f32 to vector<2x64xf32>
    %142 = arith.addf %141, %140 : vector<2x64xf32>
    %143 = arith.divf %141, %142 : vector<2x64xf32>
    %144 = vector.extract_strided_slice %133 {offsets = [0, 64], sizes = [2, 64], strides = [1, 1]} : vector<2x192xf32> to vector<2x64xf32>
    %145 = vector.extract_strided_slice %135 {offsets = [0, 64], sizes = [2, 64], strides = [1, 1]} : vector<2x192xf32> to vector<2x64xf32>
    %146 = arith.addf %144, %145 : vector<2x64xf32>
    %147 = arith.negf %146 : vector<2x64xf32>
    %148 = math.exp %147 : vector<2x64xf32>
    %cst_57 = arith.constant 1.000000e+00 : f32
    %149 = vector.broadcast %cst_57 : f32 to vector<2x64xf32>
    %150 = arith.addf %149, %148 : vector<2x64xf32>
    %151 = arith.divf %149, %150 : vector<2x64xf32>
    %152 = vector.extract_strided_slice %133 {offsets = [0, 128], sizes = [2, 64], strides = [1, 1]} : vector<2x192xf32> to vector<2x64xf32>
    %153 = vector.extract_strided_slice %135 {offsets = [0, 128], sizes = [2, 64], strides = [1, 1]} : vector<2x192xf32> to vector<2x64xf32>
    %154 = arith.addf %153, %72 : vector<2x64xf32>
    %155 = arith.mulf %143, %154 : vector<2x64xf32>
    %156 = arith.addf %152, %155 : vector<2x64xf32>
    %157 = math.tanh %156 : vector<2x64xf32>
    %cst_58 = arith.constant 1.000000e+00 : f32
    %158 = vector.broadcast %cst_58 : f32 to vector<2x64xf32>
    %159 = arith.subf %158, %151 : vector<2x64xf32>
    %160 = arith.mulf %159, %157 : vector<2x64xf32>
    %161 = arith.mulf %151, %132 : vector<2x64xf32>
    %162 = arith.addf %160, %161 : vector<2x64xf32>
    %163 = vector.extract_strided_slice %68 {offsets = [6, 0], sizes = [2, 192], strides = [1, 1]} : vector<16x192xf32> to vector<2x192xf32>
    %164 = arith.truncf %162 : vector<2x64xf32> to vector<2x64xbf16>
    %cst_59 = arith.constant dense<0.000000e+00> : vector<2x192xf32>
    %165 = tpu.matmul %164, %69, %cst_59 {dimension_numbers = #tpu.dot_dimension_numbers<[1], [0], [0], [1], [0, 0, 1, 1], [], []>} : vector<2x64xbf16>, vector<64x192xbf16>, vector<2x192xf32> -> vector<2x192xf32>
    %166 = vector.extract_strided_slice %163 {offsets = [0, 0], sizes = [2, 64], strides = [1, 1]} : vector<2x192xf32> to vector<2x64xf32>
    %167 = vector.extract_strided_slice %165 {offsets = [0, 0], sizes = [2, 64], strides = [1, 1]} : vector<2x192xf32> to vector<2x64xf32>
    %168 = arith.addf %166, %167 : vector<2x64xf32>
    %169 = arith.negf %168 : vector<2x64xf32>
    %170 = math.exp %169 : vector<2x64xf32>
    %cst_60 = arith.constant 1.000000e+00 : f32
    %171 = vector.broadcast %cst_60 : f32 to vector<2x64xf32>
    %172 = arith.addf %171, %170 : vector<2x64xf32>
    %173 = arith.divf %171, %172 : vector<2x64xf32>
    %174 = vector.extract_strided_slice %163 {offsets = [0, 64], sizes = [2, 64], strides = [1, 1]} : vector<2x192xf32> to vector<2x64xf32>
    %175 = vector.extract_strided_slice %165 {offsets = [0, 64], sizes = [2, 64], strides = [1, 1]} : vector<2x192xf32> to vector<2x64xf32>
    %176 = arith.addf %174, %175 : vector<2x64xf32>
    %177 = arith.negf %176 : vector<2x64xf32>
    %178 = math.exp %177 : vector<2x64xf32>
    %cst_61 = arith.constant 1.000000e+00 : f32
    %179 = vector.broadcast %cst_61 : f32 to vector<2x64xf32>
    %180 = arith.addf %179, %178 : vector<2x64xf32>
    %181 = arith.divf %179, %180 : vector<2x64xf32>
    %182 = vector.extract_strided_slice %163 {offsets = [0, 128], sizes = [2, 64], strides = [1, 1]} : vector<2x192xf32> to vector<2x64xf32>
    %183 = vector.extract_strided_slice %165 {offsets = [0, 128], sizes = [2, 64], strides = [1, 1]} : vector<2x192xf32> to vector<2x64xf32>
    %184 = arith.addf %183, %72 : vector<2x64xf32>
    %185 = arith.mulf %173, %184 : vector<2x64xf32>
    %186 = arith.addf %182, %185 : vector<2x64xf32>
    %187 = math.tanh %186 : vector<2x64xf32>
    %cst_62 = arith.constant 1.000000e+00 : f32
    %188 = vector.broadcast %cst_62 : f32 to vector<2x64xf32>
    %189 = arith.subf %188, %181 : vector<2x64xf32>
    %190 = arith.mulf %189, %187 : vector<2x64xf32>
    %191 = arith.mulf %181, %162 : vector<2x64xf32>
    %192 = arith.addf %190, %191 : vector<2x64xf32>
    %193 = vector.extract_strided_slice %68 {offsets = [8, 0], sizes = [2, 192], strides = [1, 1]} : vector<16x192xf32> to vector<2x192xf32>
    %194 = arith.truncf %192 : vector<2x64xf32> to vector<2x64xbf16>
    %cst_63 = arith.constant dense<0.000000e+00> : vector<2x192xf32>
    %195 = tpu.matmul %194, %69, %cst_63 {dimension_numbers = #tpu.dot_dimension_numbers<[1], [0], [0], [1], [0, 0, 1, 1], [], []>} : vector<2x64xbf16>, vector<64x192xbf16>, vector<2x192xf32> -> vector<2x192xf32>
    %196 = vector.extract_strided_slice %193 {offsets = [0, 0], sizes = [2, 64], strides = [1, 1]} : vector<2x192xf32> to vector<2x64xf32>
    %197 = vector.extract_strided_slice %195 {offsets = [0, 0], sizes = [2, 64], strides = [1, 1]} : vector<2x192xf32> to vector<2x64xf32>
    %198 = arith.addf %196, %197 : vector<2x64xf32>
    %199 = arith.negf %198 : vector<2x64xf32>
    %200 = math.exp %199 : vector<2x64xf32>
    %cst_64 = arith.constant 1.000000e+00 : f32
    %201 = vector.broadcast %cst_64 : f32 to vector<2x64xf32>
    %202 = arith.addf %201, %200 : vector<2x64xf32>
    %203 = arith.divf %201, %202 : vector<2x64xf32>
    %204 = vector.extract_strided_slice %193 {offsets = [0, 64], sizes = [2, 64], strides = [1, 1]} : vector<2x192xf32> to vector<2x64xf32>
    %205 = vector.extract_strided_slice %195 {offsets = [0, 64], sizes = [2, 64], strides = [1, 1]} : vector<2x192xf32> to vector<2x64xf32>
    %206 = arith.addf %204, %205 : vector<2x64xf32>
    %207 = arith.negf %206 : vector<2x64xf32>
    %208 = math.exp %207 : vector<2x64xf32>
    %cst_65 = arith.constant 1.000000e+00 : f32
    %209 = vector.broadcast %cst_65 : f32 to vector<2x64xf32>
    %210 = arith.addf %209, %208 : vector<2x64xf32>
    %211 = arith.divf %209, %210 : vector<2x64xf32>
    %212 = vector.extract_strided_slice %193 {offsets = [0, 128], sizes = [2, 64], strides = [1, 1]} : vector<2x192xf32> to vector<2x64xf32>
    %213 = vector.extract_strided_slice %195 {offsets = [0, 128], sizes = [2, 64], strides = [1, 1]} : vector<2x192xf32> to vector<2x64xf32>
    %214 = arith.addf %213, %72 : vector<2x64xf32>
    %215 = arith.mulf %203, %214 : vector<2x64xf32>
    %216 = arith.addf %212, %215 : vector<2x64xf32>
    %217 = math.tanh %216 : vector<2x64xf32>
    %cst_66 = arith.constant 1.000000e+00 : f32
    %218 = vector.broadcast %cst_66 : f32 to vector<2x64xf32>
    %219 = arith.subf %218, %211 : vector<2x64xf32>
    %220 = arith.mulf %219, %217 : vector<2x64xf32>
    %221 = arith.mulf %211, %192 : vector<2x64xf32>
    %222 = arith.addf %220, %221 : vector<2x64xf32>
    %223 = vector.extract_strided_slice %68 {offsets = [10, 0], sizes = [2, 192], strides = [1, 1]} : vector<16x192xf32> to vector<2x192xf32>
    %224 = arith.truncf %222 : vector<2x64xf32> to vector<2x64xbf16>
    %cst_67 = arith.constant dense<0.000000e+00> : vector<2x192xf32>
    %225 = tpu.matmul %224, %69, %cst_67 {dimension_numbers = #tpu.dot_dimension_numbers<[1], [0], [0], [1], [0, 0, 1, 1], [], []>} : vector<2x64xbf16>, vector<64x192xbf16>, vector<2x192xf32> -> vector<2x192xf32>
    %226 = vector.extract_strided_slice %223 {offsets = [0, 0], sizes = [2, 64], strides = [1, 1]} : vector<2x192xf32> to vector<2x64xf32>
    %227 = vector.extract_strided_slice %225 {offsets = [0, 0], sizes = [2, 64], strides = [1, 1]} : vector<2x192xf32> to vector<2x64xf32>
    %228 = arith.addf %226, %227 : vector<2x64xf32>
    %229 = arith.negf %228 : vector<2x64xf32>
    %230 = math.exp %229 : vector<2x64xf32>
    %cst_68 = arith.constant 1.000000e+00 : f32
    %231 = vector.broadcast %cst_68 : f32 to vector<2x64xf32>
    %232 = arith.addf %231, %230 : vector<2x64xf32>
    %233 = arith.divf %231, %232 : vector<2x64xf32>
    %234 = vector.extract_strided_slice %223 {offsets = [0, 64], sizes = [2, 64], strides = [1, 1]} : vector<2x192xf32> to vector<2x64xf32>
    %235 = vector.extract_strided_slice %225 {offsets = [0, 64], sizes = [2, 64], strides = [1, 1]} : vector<2x192xf32> to vector<2x64xf32>
    %236 = arith.addf %234, %235 : vector<2x64xf32>
    %237 = arith.negf %236 : vector<2x64xf32>
    %238 = math.exp %237 : vector<2x64xf32>
    %cst_69 = arith.constant 1.000000e+00 : f32
    %239 = vector.broadcast %cst_69 : f32 to vector<2x64xf32>
    %240 = arith.addf %239, %238 : vector<2x64xf32>
    %241 = arith.divf %239, %240 : vector<2x64xf32>
    %242 = vector.extract_strided_slice %223 {offsets = [0, 128], sizes = [2, 64], strides = [1, 1]} : vector<2x192xf32> to vector<2x64xf32>
    %243 = vector.extract_strided_slice %225 {offsets = [0, 128], sizes = [2, 64], strides = [1, 1]} : vector<2x192xf32> to vector<2x64xf32>
    %244 = arith.addf %243, %72 : vector<2x64xf32>
    %245 = arith.mulf %233, %244 : vector<2x64xf32>
    %246 = arith.addf %242, %245 : vector<2x64xf32>
    %247 = math.tanh %246 : vector<2x64xf32>
    %cst_70 = arith.constant 1.000000e+00 : f32
    %248 = vector.broadcast %cst_70 : f32 to vector<2x64xf32>
    %249 = arith.subf %248, %241 : vector<2x64xf32>
    %250 = arith.mulf %249, %247 : vector<2x64xf32>
    %251 = arith.mulf %241, %222 : vector<2x64xf32>
    %252 = arith.addf %250, %251 : vector<2x64xf32>
    %253 = vector.extract_strided_slice %68 {offsets = [12, 0], sizes = [2, 192], strides = [1, 1]} : vector<16x192xf32> to vector<2x192xf32>
    %254 = arith.truncf %252 : vector<2x64xf32> to vector<2x64xbf16>
    %cst_71 = arith.constant dense<0.000000e+00> : vector<2x192xf32>
    %255 = tpu.matmul %254, %69, %cst_71 {dimension_numbers = #tpu.dot_dimension_numbers<[1], [0], [0], [1], [0, 0, 1, 1], [], []>} : vector<2x64xbf16>, vector<64x192xbf16>, vector<2x192xf32> -> vector<2x192xf32>
    %256 = vector.extract_strided_slice %253 {offsets = [0, 0], sizes = [2, 64], strides = [1, 1]} : vector<2x192xf32> to vector<2x64xf32>
    %257 = vector.extract_strided_slice %255 {offsets = [0, 0], sizes = [2, 64], strides = [1, 1]} : vector<2x192xf32> to vector<2x64xf32>
    %258 = arith.addf %256, %257 : vector<2x64xf32>
    %259 = arith.negf %258 : vector<2x64xf32>
    %260 = math.exp %259 : vector<2x64xf32>
    %cst_72 = arith.constant 1.000000e+00 : f32
    %261 = vector.broadcast %cst_72 : f32 to vector<2x64xf32>
    %262 = arith.addf %261, %260 : vector<2x64xf32>
    %263 = arith.divf %261, %262 : vector<2x64xf32>
    %264 = vector.extract_strided_slice %253 {offsets = [0, 64], sizes = [2, 64], strides = [1, 1]} : vector<2x192xf32> to vector<2x64xf32>
    %265 = vector.extract_strided_slice %255 {offsets = [0, 64], sizes = [2, 64], strides = [1, 1]} : vector<2x192xf32> to vector<2x64xf32>
    %266 = arith.addf %264, %265 : vector<2x64xf32>
    %267 = arith.negf %266 : vector<2x64xf32>
    %268 = math.exp %267 : vector<2x64xf32>
    %cst_73 = arith.constant 1.000000e+00 : f32
    %269 = vector.broadcast %cst_73 : f32 to vector<2x64xf32>
    %270 = arith.addf %269, %268 : vector<2x64xf32>
    %271 = arith.divf %269, %270 : vector<2x64xf32>
    %272 = vector.extract_strided_slice %253 {offsets = [0, 128], sizes = [2, 64], strides = [1, 1]} : vector<2x192xf32> to vector<2x64xf32>
    %273 = vector.extract_strided_slice %255 {offsets = [0, 128], sizes = [2, 64], strides = [1, 1]} : vector<2x192xf32> to vector<2x64xf32>
    %274 = arith.addf %273, %72 : vector<2x64xf32>
    %275 = arith.mulf %263, %274 : vector<2x64xf32>
    %276 = arith.addf %272, %275 : vector<2x64xf32>
    %277 = math.tanh %276 : vector<2x64xf32>
    %cst_74 = arith.constant 1.000000e+00 : f32
    %278 = vector.broadcast %cst_74 : f32 to vector<2x64xf32>
    %279 = arith.subf %278, %271 : vector<2x64xf32>
    %280 = arith.mulf %279, %277 : vector<2x64xf32>
    %281 = arith.mulf %271, %252 : vector<2x64xf32>
    %282 = arith.addf %280, %281 : vector<2x64xf32>
    %283 = vector.extract_strided_slice %68 {offsets = [14, 0], sizes = [2, 192], strides = [1, 1]} : vector<16x192xf32> to vector<2x192xf32>
    %284 = arith.truncf %282 : vector<2x64xf32> to vector<2x64xbf16>
    %cst_75 = arith.constant dense<0.000000e+00> : vector<2x192xf32>
    %285 = tpu.matmul %284, %69, %cst_75 {dimension_numbers = #tpu.dot_dimension_numbers<[1], [0], [0], [1], [0, 0, 1, 1], [], []>} : vector<2x64xbf16>, vector<64x192xbf16>, vector<2x192xf32> -> vector<2x192xf32>
    %286 = vector.extract_strided_slice %283 {offsets = [0, 0], sizes = [2, 64], strides = [1, 1]} : vector<2x192xf32> to vector<2x64xf32>
    %287 = vector.extract_strided_slice %285 {offsets = [0, 0], sizes = [2, 64], strides = [1, 1]} : vector<2x192xf32> to vector<2x64xf32>
    %288 = arith.addf %286, %287 : vector<2x64xf32>
    %289 = arith.negf %288 : vector<2x64xf32>
    %290 = math.exp %289 : vector<2x64xf32>
    %cst_76 = arith.constant 1.000000e+00 : f32
    %291 = vector.broadcast %cst_76 : f32 to vector<2x64xf32>
    %292 = arith.addf %291, %290 : vector<2x64xf32>
    %293 = arith.divf %291, %292 : vector<2x64xf32>
    %294 = vector.extract_strided_slice %283 {offsets = [0, 64], sizes = [2, 64], strides = [1, 1]} : vector<2x192xf32> to vector<2x64xf32>
    %295 = vector.extract_strided_slice %285 {offsets = [0, 64], sizes = [2, 64], strides = [1, 1]} : vector<2x192xf32> to vector<2x64xf32>
    %296 = arith.addf %294, %295 : vector<2x64xf32>
    %297 = arith.negf %296 : vector<2x64xf32>
    %298 = math.exp %297 : vector<2x64xf32>
    %cst_77 = arith.constant 1.000000e+00 : f32
    %299 = vector.broadcast %cst_77 : f32 to vector<2x64xf32>
    %300 = arith.addf %299, %298 : vector<2x64xf32>
    %301 = arith.divf %299, %300 : vector<2x64xf32>
    %302 = vector.extract_strided_slice %283 {offsets = [0, 128], sizes = [2, 64], strides = [1, 1]} : vector<2x192xf32> to vector<2x64xf32>
    %303 = vector.extract_strided_slice %285 {offsets = [0, 128], sizes = [2, 64], strides = [1, 1]} : vector<2x192xf32> to vector<2x64xf32>
    %304 = arith.addf %303, %72 : vector<2x64xf32>
    %305 = arith.mulf %293, %304 : vector<2x64xf32>
    %306 = arith.addf %302, %305 : vector<2x64xf32>
    %307 = math.tanh %306 : vector<2x64xf32>
    %cst_78 = arith.constant 1.000000e+00 : f32
    %308 = vector.broadcast %cst_78 : f32 to vector<2x64xf32>
    %309 = arith.subf %308, %301 : vector<2x64xf32>
    %310 = arith.mulf %309, %307 : vector<2x64xf32>
    %311 = arith.mulf %301, %282 : vector<2x64xf32>
    %312 = arith.addf %310, %311 : vector<2x64xf32>
    %313 = tpu.concatenate %102, %132, %162, %192, %222, %252, %282, %312 in 0 : vector<2x64xf32>, vector<2x64xf32>, vector<2x64xf32>, vector<2x64xf32>, vector<2x64xf32>, vector<2x64xf32>, vector<2x64xf32>, vector<2x64xf32> -> vector<16x64xf32>
    %c456 = arith.constant 456 : index
    %c0_79 = arith.constant 0 : index
    %314 = vector.load %arg4[%c456, %c0_79] : memref<584x64xf32, #tpu.memory_space<vmem>>, vector<64x2xf32>
    %cst_80 = arith.constant dense<0.000000e+00> : vector<16x2xf32>
    %315 = tpu.matmul %313, %314, %cst_80 {dimension_numbers = #tpu.dot_dimension_numbers<[1], [0], [0], [1], [0, 0, 1, 1], [], []>} : vector<16x64xf32>, vector<64x2xf32>, vector<16x2xf32> -> vector<16x2xf32>
    %c520 = arith.constant 520 : index
    %c0_81 = arith.constant 0 : index
    %316 = vector.load %arg4[%c520, %c0_81] : memref<584x64xf32, #tpu.memory_space<vmem>>, vector<64x2xf32>
    %cst_82 = arith.constant dense<0.000000e+00> : vector<2x2xf32>
    %317 = tpu.matmul %42, %316, %cst_82 {dimension_numbers = #tpu.dot_dimension_numbers<[1], [0], [0], [1], [0, 0, 1, 1], [], []>} : vector<2x64xf32>, vector<64x2xf32>, vector<2x2xf32> -> vector<2x2xf32>
    %c11 = arith.constant 11 : index
    %c0_83 = arith.constant 0 : index
    %318 = vector.load %arg5[%c11, %c0_83] : memref<12x192xf32, #tpu.memory_space<vmem>>, vector<1x2xf32>
    %319 = vector.broadcast %318 : vector<1x2xf32> to vector<2x2xf32>
    %320 = arith.addf %317, %319 : vector<2x2xf32>
    %cst_84 = arith.constant 0.000000e+00 : f32
    %321 = vector.broadcast %cst_84 : f32 to vector<2x2xf32>
    %322 = vector.extract_strided_slice %315 {offsets = [0, 0], sizes = [2, 2], strides = [1, 1]} : vector<16x2xf32> to vector<2x2xf32>
    %323 = arith.addf %321, %322 : vector<2x2xf32>
    %324 = arith.addf %323, %320 : vector<2x2xf32>
    %325 = vector.extract_strided_slice %315 {offsets = [2, 0], sizes = [2, 2], strides = [1, 1]} : vector<16x2xf32> to vector<2x2xf32>
    %326 = arith.addf %324, %325 : vector<2x2xf32>
    %327 = arith.addf %326, %320 : vector<2x2xf32>
    %328 = vector.extract_strided_slice %315 {offsets = [4, 0], sizes = [2, 2], strides = [1, 1]} : vector<16x2xf32> to vector<2x2xf32>
    %329 = arith.addf %327, %328 : vector<2x2xf32>
    %330 = arith.addf %329, %320 : vector<2x2xf32>
    %331 = vector.extract_strided_slice %315 {offsets = [6, 0], sizes = [2, 2], strides = [1, 1]} : vector<16x2xf32> to vector<2x2xf32>
    %332 = arith.addf %330, %331 : vector<2x2xf32>
    %333 = arith.addf %332, %320 : vector<2x2xf32>
    %334 = vector.extract_strided_slice %315 {offsets = [8, 0], sizes = [2, 2], strides = [1, 1]} : vector<16x2xf32> to vector<2x2xf32>
    %335 = arith.addf %333, %334 : vector<2x2xf32>
    %336 = arith.addf %335, %320 : vector<2x2xf32>
    %337 = vector.extract_strided_slice %315 {offsets = [10, 0], sizes = [2, 2], strides = [1, 1]} : vector<16x2xf32> to vector<2x2xf32>
    %338 = arith.addf %336, %337 : vector<2x2xf32>
    %339 = arith.addf %338, %320 : vector<2x2xf32>
    %340 = vector.extract_strided_slice %315 {offsets = [12, 0], sizes = [2, 2], strides = [1, 1]} : vector<16x2xf32> to vector<2x2xf32>
    %341 = arith.addf %339, %340 : vector<2x2xf32>
    %342 = arith.addf %341, %320 : vector<2x2xf32>
    %343 = vector.extract_strided_slice %315 {offsets = [14, 0], sizes = [2, 2], strides = [1, 1]} : vector<16x2xf32> to vector<2x2xf32>
    %344 = arith.addf %342, %343 : vector<2x2xf32>
    %345 = arith.addf %344, %320 : vector<2x2xf32>
    %346 = tpu.concatenate %324, %327, %330, %333, %336, %339, %342, %345 in 1 : vector<2x2xf32>, vector<2x2xf32>, vector<2x2xf32>, vector<2x2xf32>, vector<2x2xf32>, vector<2x2xf32>, vector<2x2xf32>, vector<2x2xf32> -> vector<2x16xf32>
    %c0_85 = arith.constant 0 : index
    %c0_86 = arith.constant 0 : index
    %347 = vector.load %arg6[%c0_85, %c0_86] : memref<2x16xf32, #tpu.memory_space<vmem>>, vector<2x16xf32>
    tpu.vector_store %arg6[%c0_85, %c0_86], %346 {strides = array<i32>} : memref<2x16xf32, #tpu.memory_space<vmem>>, vector<2x16xf32>,
    return
  }
}

</mosaic_0001>

<llo_original>
// kernel: tpu_custom_call.1
$region0: #{tpu_custom_call.1}
  #allocation0 [shape = 'u32[]', space=smem, size = 0x4, offset = 0x4, fixed_abs, tag = 'smem constant byte address 0x4 - core index']
  #allocation1 [shape = 'u32[144,128]{1,0:T(1,128)}', space=vmem, size = 0x12000, scoped, tag = 'internal scratch']
  %s0 = inlined_call_operand.vmem [shape: bf16[16,256], index: 0, kind: input, shape index: {}]
  %s1 = inlined_call_operand.vmem [shape: f32[2,47], index: 1, kind: input, shape index: {}]
  %s2 = inlined_call_operand.vmem [shape: bf16[256,192], index: 2, kind: input, shape index: {}]
  %s3 = inlined_call_operand.vmem [shape: bf16[64,192], index: 3, kind: input, shape index: {}]
  %s4 = inlined_call_operand.vmem [shape: f32[584,64], index: 4, kind: input, shape index: {}]
  %s5 = inlined_call_operand.vmem [shape: f32[12,192], index: 5, kind: input, shape index: {}]
  %s6 = inlined_call_operand.hbm [shape: f32[2,16], index: 6, kind: output, shape index: {}]
  %s7 = sld [smem:[#allocation0]]
  $region34: #{tpu_custom_call.1} parent=0
    _
  %s9 = ssub.s32 1, %s7
  %s10 = scalar_select 0, %s9, %s7
  $region1: #{tpu_custom_call.1} parent=0
    #allocation2 [shape = 'u8[1024]{0}', space=vmem, size = 0x400, scoped, tag = 'output window, operand 0, single buffered']
    #allocation3 [shape = 's32[1]{0}', space=sflag, size = 0x4, scoped, tag = 'scoped memory for tpu_custom_call.1']
    %11 = vsyncpa [#allocation3], 0
    // Predicated region
    $region2: #{tpu_custom_call.1} parent=1 // pred_check
      _
    $region3: #{tpu_custom_call.1} parent=1 // pred_check_branch
      %13 = sbr.rel (0) target = $region5
    $region4: #{tpu_custom_call.1} parent=1 // pred_region
      _
    $region5: #{tpu_custom_call.1} parent=1 // pred_fallthru
      _
    // Predicated region
    $region6: #{tpu_custom_call.1} parent=1 // pred_check
      _
    $region7: #{tpu_custom_call.1} parent=1 // pred_check_branch
      %15 = sbr.rel (0) target = $region9
    $region8: #{tpu_custom_call.1} parent=1 // pred_region
      _
    $region9: #{tpu_custom_call.1} parent=1 // pred_fallthru
      _
    // Predicated region
    $region10: #{tpu_custom_call.1} parent=1 // pred_check
      _
    $region11: #{tpu_custom_call.1} parent=1 // pred_check_branch
      %17 = sbr.rel (0) target = $region13
    $region12: #{tpu_custom_call.1} parent=1 // pred_region
      _
    $region13: #{tpu_custom_call.1} parent=1 // pred_fallthru
      _
    // Predicated region
    $region14: #{tpu_custom_call.1} parent=1 // pred_check
      _
    $region15: #{tpu_custom_call.1} parent=1 // pred_check_branch
      %19 = sbr.rel (0) target = $region17
    $region16: #{tpu_custom_call.1} parent=1 // pred_region
      _
    $region17: #{tpu_custom_call.1} parent=1 // pred_fallthru
      _
    // Predicated region
    $region18: #{tpu_custom_call.1} parent=1 // pred_check
      _
    $region19: #{tpu_custom_call.1} parent=1 // pred_check_branch
      %21 = sbr.rel (0) target = $region21
    $region20: #{tpu_custom_call.1} parent=1 // pred_region
      _
    $region21: #{tpu_custom_call.1} parent=1 // pred_fallthru
      _
    // Predicated region
    $region22: #{tpu_custom_call.1} parent=1 // pred_check
      _
    $region23: #{tpu_custom_call.1} parent=1 // pred_check_branch
      %23 = sbr.rel (0) target = $region25
    $region24: #{tpu_custom_call.1} parent=1 // pred_region
      _
    $region25: #{tpu_custom_call.1} parent=1 // pred_fallthru
      _
    %v25 = vld [vmem:[%s1] sm:$0x3]
    %v26 = vld [vmem:[%s4 + $0x8] sm:$0xff]
    %v27 = vld [vmem:[%s4 + $0x10] sm:$0xff]
    %v28 = vld [vmem:[%s4 + $0x18] sm:$0xff]
    %v29 = vld [vmem:[%s4 + $0x20] sm:$0x7]
    %v30 = vld [vmem:[%s5 + $0x3] ss:$0 sm:$0xff]
    %32 = vrot.lane.b32.xlu0 %v25, 108
    %v33 = vpop.permute.xlu0 %32
    %vm34 = vcmask 220160
    %v35 = vsel %vm34, %v33, 0
    %vm37 = vcmask 1042432
    %v39 = vsel %vm37, %v29, 0
    %41 = vmatprep.subr.mxu0 0.0
    %42 = vmatpush1.msra.mxu0 0.0
    %43 = vmatprep.subr.mxu0 0.0
    %44 = vmatpush1.msra.mxu0 0.0
    %45 = vmatprep.subr.mxu0 0.0
    %46 = vmatpush1.msra.mxu0 0.0
    %47 = vmatprep.subr.mxu0 0.0
    %48 = vmatpush1.msra.mxu0 0.0
    %49 = vmatprep.subr.mxu0 0.0
    %50 = vmatpush1.msra.mxu0 0.0
    %51 = vmatprep.subr.mxu0 0.0
    %52 = vmatpush1.msra.mxu0 0.0
    %53 = vmatprep.subr.mxu0 0.0
    %54 = vmatpush1.msra.mxu0 0.0
    %55 = vmatprep.subr.mxu0 0.0
    %56 = vmatpush1.msra.mxu0 0.0
    %57 = vmatprep.subr.mxu0 0.0
    %58 = vmatpush1.msra.mxu0 0.0
    %59 = vmatprep.subr.mxu0 0.0
    %60 = vmatpush1.msra.mxu0 0.0
    %61 = vmatprep.subr.mxu0 0.0
    %62 = vmatpush1.msra.mxu0 0.0
    %63 = vmatprep.subr.mxu0 0.0
    %64 = vmatpush1.msra.mxu0 0.0
    %65 = vmatprep.subr.mxu0 0.0
    %66 = vmatpush1.msra.mxu0 %v39
    %67 = vmatprep.subr.mxu0 0.0
    %68 = vmatpush1.msra.mxu0 %v28
    %69 = vmatprep.subr.mxu0 0.0
    %70 = vmatpush1.msra.mxu0 %v27
    %71 = vmatprep.subr.mxu0 0.0
    %72 = vmatpush1.msra.mxu0 %v26
    %73 = vmatprep.subr.mxu0 0.0
    %74 = vmatpush2.msra.mxu0 0.0
    %75 = vmatprep.subr.mxu0 0.0
    %76 = vmatpush2.msra.mxu0 0.0
    %77 = vmatprep.subr.mxu0 0.0
    %78 = vmatpush2.msra.mxu0 0.0
    %79 = vmatprep.subr.mxu0 0.0
    %80 = vmatpush2.msra.mxu0 0.0
    %81 = vmatprep.subr.mxu0 0.0
    %82 = vmatpush2.msra.mxu0 0.0
    %83 = vmatprep.subr.mxu0 0.0
    %84 = vmatpush2.msra.mxu0 0.0
    %85 = vmatprep.subr.mxu0 0.0
    %86 = vmatpush2.msra.mxu0 0.0
    %87 = vmatprep.subr.mxu0 0.0
    %88 = vmatpush2.msra.mxu0 0.0
    %89 = vmatprep.subr.mxu0 0.0
    %90 = vmatpush2.msra.mxu0 0.0
    %91 = vmatprep.subr.mxu0 0.0
    %92 = vmatpush2.msra.mxu0 0.0
    %93 = vmatprep.subr.mxu0 0.0
    %94 = vmatpush2.msra.mxu0 0.0
    %95 = vmatprep.subr.mxu0 0.0
    %96 = vmatpush2.msra.mxu0 0.0
    %97 = vmatprep.subr.mxu0 0.0
    %98 = vmatpush2.msra.mxu0 0.0
    %99 = vmatprep.subr.mxu0 0.0
    %100 = vmatpush2.msra.mxu0 0.0
    %101 = vmatprep.subr.mxu0 0.0
    %102 = vmatpush2.msra.mxu0 0.0
    %103 = vmatprep.subr.mxu0 0.0
    %104 = vmatpush2.msra.mxu0 0.0
    %105 = vmatprep.mubr.f32.mxu0 0.0
    %106 = vmatmul.mubr.f32.gmra.mxu0 %v35
    %v107 = vpop.f32.mrf.mxu0
    %v108 = vadd.f32 %v30, %v107
    %v109 = vpop.f32.mrf.mxu0
    %110 = vdwg.mxu0
    %v111 = vmax.f32 %v108, 0.0
    %v112 = vld [vmem:[%s4 + $0x28] sm:$0xff]
    %v113 = vld [vmem:[%s4 + $0x30] sm:$0xff]
    %v114 = vld [vmem:[%s4 + $0x38] sm:$0xff]
    %v115 = vld [vmem:[%s4 + $0x40] sm:$0xff]
    %v116 = vld [vmem:[%s5 + $0x4] ss:$0 sm:$0xff]
    %vm117 = vcmask 261120
    %v119 = vsel %vm117, %v111, 0
    %121 = vmatprep.subr.mxu0 0.0
    %122 = vmatpush1.msra.mxu0 0.0
    %123 = vmatprep.subr.mxu0 0.0
    %124 = vmatpush1.msra.mxu0 0.0
    %125 = vmatprep.subr.mxu0 0.0
    %126 = vmatpush1.msra.mxu0 0.0
    %127 = vmatprep.subr.mxu0 0.0
    %128 = vmatpush1.msra.mxu0 0.0
    %129 = vmatprep.subr.mxu0 0.0
    %130 = vmatpush1.msra.mxu0 0.0
    %131 = vmatprep.subr.mxu0 0.0
    %132 = vmatpush1.msra.mxu0 0.0
    %133 = vmatprep.subr.mxu0 0.0
    %134 = vmatpush1.msra.mxu0 0.0
    %135 = vmatprep.subr.mxu0 0.0
    %136 = vmatpush1.msra.mxu0 0.0
    %137 = vmatprep.subr.mxu0 0.0
    %138 = vmatpush1.msra.mxu0 0.0
    %139 = vmatprep.subr.mxu0 0.0
    %140 = vmatpush1.msra.mxu0 0.0
    %141 = vmatprep.subr.mxu0 0.0
    %142 = vmatpush1.msra.mxu0 0.0
    %143 = vmatprep.subr.mxu0 0.0
    %144 = vmatpush1.msra.mxu0 0.0
    %145 = vmatprep.subr.mxu0 0.0
    %146 = vmatpush1.msra.mxu0 %v115
    %147 = vmatprep.subr.mxu0 0.0
    %148 = vmatpush1.msra.mxu0 %v114
    %149 = vmatprep.subr.mxu0 0.0
    %150 = vmatpush1.msra.mxu0 %v113
    %151 = vmatprep.subr.mxu0 0.0
    %152 = vmatpush1.msra.mxu0 %v112
    %153 = vmatprep.subr.mxu0 0.0
    %154 = vmatpush2.msra.mxu0 0.0
    %155 = vmatprep.subr.mxu0 0.0
    %156 = vmatpush2.msra.mxu0 0.0
    %157 = vmatprep.subr.mxu0 0.0
    %158 = vmatpush2.msra.mxu0 0.0
    %159 = vmatprep.subr.mxu0 0.0
    %160 = vmatpush2.msra.mxu0 0.0
    %161 = vmatprep.subr.mxu0 0.0
    %162 = vmatpush2.msra.mxu0 0.0
    %163 = vmatprep.subr.mxu0 0.0
    %164 = vmatpush2.msra.mxu0 0.0
    %165 = vmatprep.subr.mxu0 0.0
    %166 = vmatpush2.msra.mxu0 0.0
    %167 = vmatprep.subr.mxu0 0.0
    %168 = vmatpush2.msra.mxu0 0.0
    %169 = vmatprep.subr.mxu0 0.0
    %170 = vmatpush2.msra.mxu0 0.0
    %171 = vmatprep.subr.mxu0 0.0
    %172 = vmatpush2.msra.mxu0 0.0
    %173 = vmatprep.subr.mxu0 0.0
    %174 = vmatpush2.msra.mxu0 0.0
    %175 = vmatprep.subr.mxu0 0.0
    %176 = vmatpush2.msra.mxu0 0.0
    %177 = vmatprep.subr.mxu0 0.0
    %178 = vmatpush2.msra.mxu0 0.0
    %179 = vmatprep.subr.mxu0 0.0
    %180 = vmatpush2.msra.mxu0 0.0
    %181 = vmatprep.subr.mxu0 0.0
    %182 = vmatpush2.msra.mxu0 0.0
    %183 = vmatprep.subr.mxu0 0.0
    %184 = vmatpush2.msra.mxu0 0.0
    %185 = vmatprep.mubr.f32.mxu0 0.0
    %186 = vmatmul.mubr.f32.gmra.mxu0 %v119
    %v187 = vpop.f32.mrf.mxu0
    %v188 = vadd.f32 %v116, %v187
    %v189 = vpop.f32.mrf.mxu0
    %190 = vdwg.mxu0
    %v191 = vld [vmem:[%s4 + $0x48] sm:$0xff]
    %v192 = vld [vmem:[%s4 + $0x50] sm:$0xff]
    %v193 = vld [vmem:[%s4 + $0x58] sm:$0x3]
    %v194 = vld [vmem:[%s4 + $0x60] sm:$0xf]
    %vm195 = vcmask 31744
    %v197 = vsel %vm195, %v188, 0
    %vm199 = vcmask 1043456
    %v201 = vsel %vm199, %v194, 0
    %203 = vmatprep.subr.mxu0 0.0
    %204 = vmatpush1.msra.mxu0 0.0
    %205 = vmatprep.subr.mxu0 0.0
    %206 = vmatpush1.msra.mxu0 0.0
    %207 = vmatprep.subr.mxu0 0.0
    %208 = vmatpush1.msra.mxu0 0.0
    %209 = vmatprep.subr.mxu0 0.0
    %210 = vmatpush1.msra.mxu0 0.0
    %211 = vmatprep.subr.mxu0 0.0
    %212 = vmatpush1.msra.mxu0 0.0
    %213 = vmatprep.subr.mxu0 0.0
    %214 = vmatpush1.msra.mxu0 0.0
    %215 = vmatprep.subr.mxu0 0.0
    %216 = vmatpush1.msra.mxu0 0.0
    %217 = vmatprep.subr.mxu0 0.0
    %218 = vmatpush1.msra.mxu0 0.0
    %219 = vmatprep.subr.mxu0 0.0
    %220 = vmatpush1.msra.mxu0 0.0
    %221 = vmatprep.subr.mxu0 0.0
    %222 = vmatpush1.msra.mxu0 0.0
    %223 = vmatprep.subr.mxu0 0.0
    %224 = vmatpush1.msra.mxu0 0.0
    %225 = vmatprep.subr.mxu0 0.0
    %226 = vmatpush1.msra.mxu0 0.0
    %227 = vmatprep.subr.mxu0 0.0
    %228 = vmatpush1.msra.mxu0 0.0
    %229 = vmatprep.subr.mxu0 0.0
    %230 = vmatpush1.msra.mxu0 0.0
    %231 = vmatprep.subr.mxu0 0.0
    %232 = vmatpush1.msra.mxu0 0.0
    %233 = vmatprep.subr.mxu0 0.0
    %234 = vmatpush1.msra.mxu0 %v201
    %235 = vmatprep.subr.mxu0 0.0
    %236 = vmatpush2.msra.mxu0 0.0
    %237 = vmatprep.subr.mxu0 0.0
    %238 = vmatpush2.msra.mxu0 0.0
    %239 = vmatprep.subr.mxu0 0.0
    %240 = vmatpush2.msra.mxu0 0.0
    %241 = vmatprep.subr.mxu0 0.0
    %242 = vmatpush2.msra.mxu0 0.0
    %243 = vmatprep.subr.mxu0 0.0
    %244 = vmatpush2.msra.mxu0 0.0
    %245 = vmatprep.subr.mxu0 0.0
    %246 = vmatpush2.msra.mxu0 0.0
    %247 = vmatprep.subr.mxu0 0.0
    %248 = vmatpush2.msra.mxu0 0.0
    %249 = vmatprep.subr.mxu0 0.0
    %250 = vmatpush2.msra.mxu0 0.0
    %251 = vmatprep.subr.mxu0 0.0
    %252 = vmatpush2.msra.mxu0 0.0
    %253 = vmatprep.subr.mxu0 0.0
    %254 = vmatpush2.msra.mxu0 0.0
    %255 = vmatprep.subr.mxu0 0.0
    %256 = vmatpush2.msra.mxu0 0.0
    %257 = vmatprep.subr.mxu0 0.0
    %258 = vmatpush2.msra.mxu0 0.0
    %259 = vmatprep.subr.mxu0 0.0
    %260 = vmatpush2.msra.mxu0 0.0
    %261 = vmatprep.subr.mxu0 0.0
    %262 = vmatpush2.msra.mxu0 0.0
    %263 = vmatprep.subr.mxu0 0.0
    %264 = vmatpush2.msra.mxu0 0.0
    %265 = vmatprep.subr.mxu0 0.0
    %266 = vmatpush2.msra.mxu0 0.0
    %267 = vmatprep.mubr.f32.mxu0 0.0
    %268 = vmatmul.mubr.f32.gmra.mxu0 %v197
    %v269 = vpop.f32.mrf.mxu0
    %v270 = vadd.f32 0.0, %v269
    %v271 = vpop.f32.mrf.mxu0
    %272 = vdwg.mxu0
    %273 = vrot.lane.b32.xlu0 %v25, 126
    %v274 = vpop.permute.xlu0 %273
    %vm275 = vcmask 146432
    %v276 = vsel %vm275, %v274, 0
    %vm278 = vcmask 1041408
    %v280 = vsel %vm278, %v193, 0
    %282 = vmatprep.subr.mxu0 0.0
    %283 = vmatpush1.msra.mxu0 0.0
    %284 = vmatprep.subr.mxu0 0.0
    %285 = vmatpush1.msra.mxu0 0.0
    %286 = vmatprep.subr.mxu0 0.0
    %287 = vmatpush1.msra.mxu0 0.0
    %288 = vmatprep.subr.mxu0 0.0
    %289 = vmatpush1.msra.mxu0 0.0
    %290 = vmatprep.subr.mxu0 0.0
    %291 = vmatpush1.msra.mxu0 0.0
    %292 = vmatprep.subr.mxu0 0.0
    %293 = vmatpush1.msra.mxu0 0.0
    %294 = vmatprep.subr.mxu0 0.0
    %295 = vmatpush1.msra.mxu0 0.0
    %296 = vmatprep.subr.mxu0 0.0
    %297 = vmatpush1.msra.mxu0 0.0
    %298 = vmatprep.subr.mxu0 0.0
    %299 = vmatpush1.msra.mxu0 0.0
    %300 = vmatprep.subr.mxu0 0.0
    %301 = vmatpush1.msra.mxu0 0.0
    %302 = vmatprep.subr.mxu0 0.0
    %303 = vmatpush1.msra.mxu0 0.0
    %304 = vmatprep.subr.mxu0 0.0
    %305 = vmatpush1.msra.mxu0 0.0
    %306 = vmatprep.subr.mxu0 0.0
    %307 = vmatpush1.msra.mxu0 0.0
    %308 = vmatprep.subr.mxu0 0.0
    %309 = vmatpush1.msra.mxu0 %v280
    %310 = vmatprep.subr.mxu0 0.0
    %311 = vmatpush1.msra.mxu0 %v192
    %312 = vmatprep.subr.mxu0 0.0
    %313 = vmatpush1.msra.mxu0 %v191
    %314 = vmatprep.subr.mxu0 0.0
    %315 = vmatpush2.msra.mxu0 0.0
    %316 = vmatprep.subr.mxu0 0.0
    %317 = vmatpush2.msra.mxu0 0.0
    %318 = vmatprep.subr.mxu0 0.0
    %319 = vmatpush2.msra.mxu0 0.0
    %320 = vmatprep.subr.mxu0 0.0
    %321 = vmatpush2.msra.mxu0 0.0
    %322 = vmatprep.subr.mxu0 0.0
    %323 = vmatpush2.msra.mxu0 0.0
    %324 = vmatprep.subr.mxu0 0.0
    %325 = vmatpush2.msra.mxu0 0.0
    %326 = vmatprep.subr.mxu0 0.0
    %327 = vmatpush2.msra.mxu0 0.0
    %328 = vmatprep.subr.mxu0 0.0
    %329 = vmatpush2.msra.mxu0 0.0
    %330 = vmatprep.subr.mxu0 0.0
    %331 = vmatpush2.msra.mxu0 0.0
    %332 = vmatprep.subr.mxu0 0.0
    %333 = vmatpush2.msra.mxu0 0.0
    %334 = vmatprep.subr.mxu0 0.0
    %335 = vmatpush2.msra.mxu0 0.0
    %336 = vmatprep.subr.mxu0 0.0
    %337 = vmatpush2.msra.mxu0 0.0
    %338 = vmatprep.subr.mxu0 0.0
    %339 = vmatpush2.msra.mxu0 0.0
    %340 = vmatprep.subr.mxu0 0.0
    %341 = vmatpush2.msra.mxu0 0.0
    %342 = vmatprep.subr.mxu0 0.0
    %343 = vmatpush2.msra.mxu0 0.0
    %344 = vmatprep.subr.mxu0 0.0
    %345 = vmatpush2.msra.mxu0 0.0
    %346 = vmatprep.mubr.f32.mxu0 0.0
    %347 = vmatmul.mubr.f32.gmra.mxu0 %v276
    %v348 = vpop.f32.mrf.mxu0
    %v349 = vadd.f32 %v270, %v348
    %v350 = vpop.f32.mrf.mxu0
    %351 = vdwg.mxu0
    %v352 = vld [vmem:[%s5 + $0x5] ss:$0 sm:$0xff]
    %v353 = vadd.f32 %v349, %v352
    %v354 = vmax.f32 %v353, 0.0
    %v355 = vld [vmem:[%s4 + $0x68] sm:$0xff]
    %v356 = vld [vmem:[%s4 + $0x70] sm:$0xff]
    %v357 = vld [vmem:[%s4 + $0x78] sm:$0xff]
    %v358 = vld [vmem:[%s4 + $0x80] sm:$0xff]
    %v359 = vld [vmem:[%s4 + $0x88] sm:$0xff]
    %v360 = vld [vmem:[%s4 + $0x90] sm:$0xff]
    %v361 = vld [vmem:[%s4 + $0x98] sm:$0xff]
    %v362 = vld [vmem:[%s4 + $0xa0] sm:$0xff]
    %v363 = vld [vmem:[%s5 + $0x6] ss:$0 sm:$0xff]
    %vm364 = vcmask 523264
    %v366 = vsel %vm364, %v354, 0
    %368 = vmatprep.subr.mxu0 0.0
    %369 = vmatpush1.msra.mxu0 0.0
    %370 = vmatprep.subr.mxu0 0.0
    %371 = vmatpush1.msra.mxu0 0.0
    %372 = vmatprep.subr.mxu0 0.0
    %373 = vmatpush1.msra.mxu0 0.0
    %374 = vmatprep.subr.mxu0 0.0
    %375 = vmatpush1.msra.mxu0 0.0
    %376 = vmatprep.subr.mxu0 0.0
    %377 = vmatpush1.msra.mxu0 0.0
    %378 = vmatprep.subr.mxu0 0.0
    %379 = vmatpush1.msra.mxu0 0.0
    %380 = vmatprep.subr.mxu0 0.0
    %381 = vmatpush1.msra.mxu0 0.0
    %382 = vmatprep.subr.mxu0 0.0
    %383 = vmatpush1.msra.mxu0 0.0
    %384 = vmatprep.subr.mxu0 0.0
    %385 = vmatpush1.msra.mxu0 %v362
    %386 = vmatprep.subr.mxu0 0.0
    %387 = vmatpush1.msra.mxu0 %v361
    %388 = vmatprep.subr.mxu0 0.0
    %389 = vmatpush1.msra.mxu0 %v360
    %390 = vmatprep.subr.mxu0 0.0
    %391 = vmatpush1.msra.mxu0 %v359
    %392 = vmatprep.subr.mxu0 0.0
    %393 = vmatpush1.msra.mxu0 %v358
    %394 = vmatprep.subr.mxu0 0.0
    %395 = vmatpush1.msra.mxu0 %v357
    %396 = vmatprep.subr.mxu0 0.0
    %397 = vmatpush1.msra.mxu0 %v356
    %398 = vmatprep.subr.mxu0 0.0
    %399 = vmatpush1.msra.mxu0 %v355
    %400 = vmatprep.subr.mxu0 0.0
    %401 = vmatpush2.msra.mxu0 0.0
    %402 = vmatprep.subr.mxu0 0.0
    %403 = vmatpush2.msra.mxu0 0.0
    %404 = vmatprep.subr.mxu0 0.0
    %405 = vmatpush2.msra.mxu0 0.0
    %406 = vmatprep.subr.mxu0 0.0
    %407 = vmatpush2.msra.mxu0 0.0
    %408 = vmatprep.subr.mxu0 0.0
    %409 = vmatpush2.msra.mxu0 0.0
    %410 = vmatprep.subr.mxu0 0.0
    %411 = vmatpush2.msra.mxu0 0.0
    %412 = vmatprep.subr.mxu0 0.0
    %413 = vmatpush2.msra.mxu0 0.0
    %414 = vmatprep.subr.mxu0 0.0
    %415 = vmatpush2.msra.mxu0 0.0
    %416 = vmatprep.subr.mxu0 0.0
    %417 = vmatpush2.msra.mxu0 0.0
    %418 = vmatprep.subr.mxu0 0.0
    %419 = vmatpush2.msra.mxu0 0.0
    %420 = vmatprep.subr.mxu0 0.0
    %421 = vmatpush2.msra.mxu0 0.0
    %422 = vmatprep.subr.mxu0 0.0
    %423 = vmatpush2.msra.mxu0 0.0
    %424 = vmatprep.subr.mxu0 0.0
    %425 = vmatpush2.msra.mxu0 0.0
    %426 = vmatprep.subr.mxu0 0.0
    %427 = vmatpush2.msra.mxu0 0.0
    %428 = vmatprep.subr.mxu0 0.0
    %429 = vmatpush2.msra.mxu0 0.0
    %430 = vmatprep.subr.mxu0 0.0
    %431 = vmatpush2.msra.mxu0 0.0
    %432 = vmatprep.mubr.f32.mxu0 0.0
    %433 = vmatmul.mubr.f32.gmra.mxu0 %v366
    %v434 = vpop.f32.mrf.mxu0
    %v435 = vadd.f32 %v363, %v434
    %v436 = vpop.f32.mrf.mxu0
    %437 = vdwg.mxu0
    %v438 = vld [vmem:[%s4 + $0xa8] sm:$0xff]
    %v439 = vld [vmem:[%s4 + $0xb0] sm:$0xff]
    %v440 = vld [vmem:[%s4 + $0xb8] sm:$0xff]
    %v441 = vld [vmem:[%s4 + $0xc0] sm:$0xff]
    %v442 = vld [vmem:[%s5 + $0x7] ss:$0 sm:$0xff]
    %v444 = vsel %vm117, %v435, 0
    %446 = vmatprep.subr.mxu0 0.0
    %447 = vmatpush1.msra.mxu0 0.0
    %448 = vmatprep.subr.mxu0 0.0
    %449 = vmatpush1.msra.mxu0 0.0
    %450 = vmatprep.subr.mxu0 0.0
    %451 = vmatpush1.msra.mxu0 0.0
    %452 = vmatprep.subr.mxu0 0.0
    %453 = vmatpush1.msra.mxu0 0.0
    %454 = vmatprep.subr.mxu0 0.0
    %455 = vmatpush1.msra.mxu0 0.0
    %456 = vmatprep.subr.mxu0 0.0
    %457 = vmatpush1.msra.mxu0 0.0
    %458 = vmatprep.subr.mxu0 0.0
    %459 = vmatpush1.msra.mxu0 0.0
    %460 = vmatprep.subr.mxu0 0.0
    %461 = vmatpush1.msra.mxu0 0.0
    %462 = vmatprep.subr.mxu0 0.0
    %463 = vmatpush1.msra.mxu0 0.0
    %464 = vmatprep.subr.mxu0 0.0
    %465 = vmatpush1.msra.mxu0 0.0
    %466 = vmatprep.subr.mxu0 0.0
    %467 = vmatpush1.msra.mxu0 0.0
    %468 = vmatprep.subr.mxu0 0.0
    %469 = vmatpush1.msra.mxu0 0.0
    %470 = vmatprep.subr.mxu0 0.0
    %471 = vmatpush1.msra.mxu0 %v441
    %472 = vmatprep.subr.mxu0 0.0
    %473 = vmatpush1.msra.mxu0 %v440
    %474 = vmatprep.subr.mxu0 0.0
    %475 = vmatpush1.msra.mxu0 %v439
    %476 = vmatprep.subr.mxu0 0.0
    %477 = vmatpush1.msra.mxu0 %v438
    %478 = vmatprep.subr.mxu0 0.0
    %479 = vmatpush2.msra.mxu0 0.0
    %480 = vmatprep.subr.mxu0 0.0
    %481 = vmatpush2.msra.mxu0 0.0
    %482 = vmatprep.subr.mxu0 0.0
    %483 = vmatpush2.msra.mxu0 0.0
    %484 = vmatprep.subr.mxu0 0.0
    %485 = vmatpush2.msra.mxu0 0.0
    %486 = vmatprep.subr.mxu0 0.0
    %487 = vmatpush2.msra.mxu0 0.0
    %488 = vmatprep.subr.mxu0 0.0
    %489 = vmatpush2.msra.mxu0 0.0
    %490 = vmatprep.subr.mxu0 0.0
    %491 = vmatpush2.msra.mxu0 0.0
    %492 = vmatprep.subr.mxu0 0.0
    %493 = vmatpush2.msra.mxu0 0.0
    %494 = vmatprep.subr.mxu0 0.0
    %495 = vmatpush2.msra.mxu0 0.0
    %496 = vmatprep.subr.mxu0 0.0
    %497 = vmatpush2.msra.mxu0 0.0
    %498 = vmatprep.subr.mxu0 0.0
    %499 = vmatpush2.msra.mxu0 0.0
    %500 = vmatprep.subr.mxu0 0.0
    %501 = vmatpush2.msra.mxu0 0.0
    %502 = vmatprep.subr.mxu0 0.0
    %503 = vmatpush2.msra.mxu0 0.0
    %504 = vmatprep.subr.mxu0 0.0
    %505 = vmatpush2.msra.mxu0 0.0
    %506 = vmatprep.subr.mxu0 0.0
    %507 = vmatpush2.msra.mxu0 0.0
    %508 = vmatprep.subr.mxu0 0.0
    %509 = vmatpush2.msra.mxu0 0.0
    %510 = vmatprep.mubr.f32.mxu0 0.0
    %511 = vmatmul.mubr.f32.gmra.mxu0 %v444
    %v512 = vpop.f32.mrf.mxu0
    %v513 = vadd.f32 %v442, %v512
    %v514 = vpop.f32.mrf.mxu0
    %515 = vdwg.mxu0
    %v516 = vmax.f32 %v513, 0.0
    %v517 = vld [vmem:[%s4 + $0xc8] sm:$0xff]
    %v518 = vld [vmem:[%s4 + $0xd0] sm:$0xff]
    %v519 = vld [vmem:[%s4 + $0xd8] sm:$0xff]
    %v520 = vld [vmem:[%s4 + $0xe0] sm:$0xff]
    %v521 = vld [vmem:[%s4 + $0xe8] sm:$0xff]
    %v522 = vld [vmem:[%s4 + $0xf0] sm:$0xff]
    %v523 = vld [vmem:[%s4 + $0xf8] sm:$0xff]
    %v524 = vld [vmem:[%s4 + $0x100] sm:$0xff]
    %v525 = vld [vmem:[%s5 + $0x10] ss:$0 sm:$0xff]
    %v527 = vsel %vm364, %v516, 0
    %529 = vmatprep.subr.mxu0 0.0
    %530 = vmatpush1.msra.mxu0 0.0
    %531 = vmatprep.subr.mxu0 0.0
    %532 = vmatpush1.msra.mxu0 0.0
    %533 = vmatprep.subr.mxu0 0.0
    %534 = vmatpush1.msra.mxu0 0.0
    %535 = vmatprep.subr.mxu0 0.0
    %536 = vmatpush1.msra.mxu0 0.0
    %537 = vmatprep.subr.mxu0 0.0
    %538 = vmatpush1.msra.mxu0 0.0
    %539 = vmatprep.subr.mxu0 0.0
    %540 = vmatpush1.msra.mxu0 0.0
    %541 = vmatprep.subr.mxu0 0.0
    %542 = vmatpush1.msra.mxu0 0.0
    %543 = vmatprep.subr.mxu0 0.0
    %544 = vmatpush1.msra.mxu0 0.0
    %545 = vmatprep.subr.mxu0 0.0
    %546 = vmatpush1.msra.mxu0 %v524
    %547 = vmatprep.subr.mxu0 0.0
    %548 = vmatpush1.msra.mxu0 %v523
    %549 = vmatprep.subr.mxu0 0.0
    %550 = vmatpush1.msra.mxu0 %v522
    %551 = vmatprep.subr.mxu0 0.0
    %552 = vmatpush1.msra.mxu0 %v521
    %553 = vmatprep.subr.mxu0 0.0
    %554 = vmatpush1.msra.mxu0 %v520
    %555 = vmatprep.subr.mxu0 0.0
    %556 = vmatpush1.msra.mxu0 %v519
    %557 = vmatprep.subr.mxu0 0.0
    %558 = vmatpush1.msra.mxu0 %v518
    %559 = vmatprep.subr.mxu0 0.0
    %560 = vmatpush1.msra.mxu0 %v517
    %561 = vmatprep.subr.mxu0 0.0
    %562 = vmatpush2.msra.mxu0 0.0
    %563 = vmatprep.subr.mxu0 0.0
    %564 = vmatpush2.msra.mxu0 0.0
    %565 = vmatprep.subr.mxu0 0.0
    %566 = vmatpush2.msra.mxu0 0.0
    %567 = vmatprep.subr.mxu0 0.0
    %568 = vmatpush2.msra.mxu0 0.0
    %569 = vmatprep.subr.mxu0 0.0
    %570 = vmatpush2.msra.mxu0 0.0
    %571 = vmatprep.subr.mxu0 0.0
    %572 = vmatpush2.msra.mxu0 0.0
    %573 = vmatprep.subr.mxu0 0.0
    %574 = vmatpush2.msra.mxu0 0.0
    %575 = vmatprep.subr.mxu0 0.0
    %576 = vmatpush2.msra.mxu0 0.0
    %577 = vmatprep.subr.mxu0 0.0
    %578 = vmatpush2.msra.mxu0 0.0
    %579 = vmatprep.subr.mxu0 0.0
    %580 = vmatpush2.msra.mxu0 0.0
    %581 = vmatprep.subr.mxu0 0.0
    %582 = vmatpush2.msra.mxu0 0.0
    %583 = vmatprep.subr.mxu0 0.0
    %584 = vmatpush2.msra.mxu0 0.0
    %585 = vmatprep.subr.mxu0 0.0
    %586 = vmatpush2.msra.mxu0 0.0
    %587 = vmatprep.subr.mxu0 0.0
    %588 = vmatpush2.msra.mxu0 0.0
    %589 = vmatprep.subr.mxu0 0.0
    %590 = vmatpush2.msra.mxu0 0.0
    %591 = vmatprep.subr.mxu0 0.0
    %592 = vmatpush2.msra.mxu0 0.0
    %593 = vmatprep.mubr.f32.mxu0 0.0
    %594 = vmatmul.mubr.f32.gmra.mxu0 %v527
    %v595 = vpop.f32.mrf.mxu0
    %v596 = vadd.f32 %v525, %v595
    %v597 = vpop.f32.mrf.mxu0
    %598 = vdwg.mxu0
    %v599 = vld [vmem:[%s4] sm:$0x3]
    %v600 = vld [vmem:[%s5 + $0x2] ss:$0 sm:$0xff]
    %vm601 = vcmask 15360
    %v602 = vsel %vm601, %v25, 0
    %v605 = vsel %vm278, %v599, 0
    %607 = vmatprep.subr.mxu0 0.0
    %608 = vmatpush1.msra.mxu0 0.0
    %609 = vmatprep.subr.mxu0 0.0
    %610 = vmatpush1.msra.mxu0 0.0
    %611 = vmatprep.subr.mxu0 0.0
    %612 = vmatpush1.msra.mxu0 0.0
    %613 = vmatprep.subr.mxu0 0.0
    %614 = vmatpush1.msra.mxu0 0.0
    %615 = vmatprep.subr.mxu0 0.0
    %616 = vmatpush1.msra.mxu0 0.0
    %617 = vmatprep.subr.mxu0 0.0
    %618 = vmatpush1.msra.mxu0 0.0
    %619 = vmatprep.subr.mxu0 0.0
    %620 = vmatpush1.msra.mxu0 0.0
    %621 = vmatprep.subr.mxu0 0.0
    %622 = vmatpush1.msra.mxu0 0.0
    %623 = vmatprep.subr.mxu0 0.0
    %624 = vmatpush1.msra.mxu0 0.0
    %625 = vmatprep.subr.mxu0 0.0
    %626 = vmatpush1.msra.mxu0 0.0
    %627 = vmatprep.subr.mxu0 0.0
    %628 = vmatpush1.msra.mxu0 0.0
    %629 = vmatprep.subr.mxu0 0.0
    %630 = vmatpush1.msra.mxu0 0.0
    %631 = vmatprep.subr.mxu0 0.0
    %632 = vmatpush1.msra.mxu0 0.0
    %633 = vmatprep.subr.mxu0 0.0
    %634 = vmatpush1.msra.mxu0 0.0
    %635 = vmatprep.subr.mxu0 0.0
    %636 = vmatpush1.msra.mxu0 0.0
    %637 = vmatprep.subr.mxu0 0.0
    %638 = vmatpush1.msra.mxu0 %v605
    %639 = vmatprep.subr.mxu0 0.0
    %640 = vmatpush2.msra.mxu0 0.0
    %641 = vmatprep.subr.mxu0 0.0
    %642 = vmatpush2.msra.mxu0 0.0
    %643 = vmatprep.subr.mxu0 0.0
    %644 = vmatpush2.msra.mxu0 0.0
    %645 = vmatprep.subr.mxu0 0.0
    %646 = vmatpush2.msra.mxu0 0.0
    %647 = vmatprep.subr.mxu0 0.0
    %648 = vmatpush2.msra.mxu0 0.0
    %649 = vmatprep.subr.mxu0 0.0
    %650 = vmatpush2.msra.mxu0 0.0
    %651 = vmatprep.subr.mxu0 0.0
    %652 = vmatpush2.msra.mxu0 0.0
    %653 = vmatprep.subr.mxu0 0.0
    %654 = vmatpush2.msra.mxu0 0.0
    %655 = vmatprep.subr.mxu0 0.0
    %656 = vmatpush2.msra.mxu0 0.0
    %657 = vmatprep.subr.mxu0 0.0
    %658 = vmatpush2.msra.mxu0 0.0
    %659 = vmatprep.subr.mxu0 0.0
    %660 = vmatpush2.msra.mxu0 0.0
    %661 = vmatprep.subr.mxu0 0.0
    %662 = vmatpush2.msra.mxu0 0.0
    %663 = vmatprep.subr.mxu0 0.0
    %664 = vmatpush2.msra.mxu0 0.0
    %665 = vmatprep.subr.mxu0 0.0
    %666 = vmatpush2.msra.mxu0 0.0
    %667 = vmatprep.subr.mxu0 0.0
    %668 = vmatpush2.msra.mxu0 0.0
    %669 = vmatprep.subr.mxu0 0.0
    %670 = vmatpush2.msra.mxu0 0.0
    %671 = vmatprep.mubr.f32.mxu0 0.0
    %672 = vmatmul.mubr.f32.gmra.mxu0 %v602
    %v673 = vpop.f32.mrf.mxu0
    %v674 = vadd.f32 %v600, %v673
    %v675 = vpop.f32.mrf.mxu0
    %676 = vdwg.mxu0
    %v677 = vld [vmem:[%s4 + $0x108] sm:$0xff]
    %v678 = vld [vmem:[%s4 + $0x110] sm:$0xff]
    %v679 = vld [vmem:[%s4 + $0x118] sm:$0xff]
    %v680 = vld [vmem:[%s4 + $0x120] sm:$0xff]
    %v681 = vld [vmem:[%s4 + $0x128] sm:$0xff]
    %v682 = vld [vmem:[%s4 + $0x130] sm:$0xff]
    %v683 = vld [vmem:[%s4 + $0x138] sm:$0xff]
    %v684 = vld [vmem:[%s4 + $0x140] sm:$0xff]
    %v685 = vld [vmem:[%s4 + $0x148] sm:$0xff]
    %v686 = vld [vmem:[%s4 + $0x150] sm:$0xff]
    %v687 = vld [vmem:[%s4 + $0x158] sm:$0xff]
    %v688 = vld [vmem:[%s4 + $0x160] sm:$0xff]
    %v689 = vld [vmem:[%s4 + $0x168] sm:$0xff]
    %v690 = vld [vmem:[%s4 + $0x170] sm:$0xff]
    %v691 = vld [vmem:[%s4 + $0x178] sm:$0xff]
    %v692 = vld [vmem:[%s4 + $0x180] sm:$0xff]
    %v694 = vsel %vm364, %v596, 0
    %696 = vmatprep.subr.mxu0 0.0
    %697 = vmatpush1.msra.mxu0 0.0
    %698 = vmatprep.subr.mxu0 0.0
    %699 = vmatpush1.msra.mxu0 0.0
    %700 = vmatprep.subr.mxu0 0.0
    %701 = vmatpush1.msra.mxu0 0.0
    %702 = vmatprep.subr.mxu0 0.0
    %703 = vmatpush1.msra.mxu0 0.0
    %704 = vmatprep.subr.mxu0 0.0
    %705 = vmatpush1.msra.mxu0 0.0
    %706 = vmatprep.subr.mxu0 0.0
    %707 = vmatpush1.msra.mxu0 0.0
    %708 = vmatprep.subr.mxu0 0.0
    %709 = vmatpush1.msra.mxu0 0.0
    %710 = vmatprep.subr.mxu0 0.0
    %711 = vmatpush1.msra.mxu0 0.0
    %712 = vmatprep.subr.mxu0 0.0
    %713 = vmatpush1.msra.mxu0 %v692
    %714 = vmatprep.subr.mxu0 0.0
    %715 = vmatpush1.msra.mxu0 %v691
    %716 = vmatprep.subr.mxu0 0.0
    %717 = vmatpush1.msra.mxu0 %v690
    %718 = vmatprep.subr.mxu0 0.0
    %719 = vmatpush1.msra.mxu0 %v689
    %720 = vmatprep.subr.mxu0 0.0
    %721 = vmatpush1.msra.mxu0 %v688
    %722 = vmatprep.subr.mxu0 0.0
    %723 = vmatpush1.msra.mxu0 %v687
    %724 = vmatprep.subr.mxu0 0.0
    %725 = vmatpush1.msra.mxu0 %v686
    %726 = vmatprep.subr.mxu0 0.0
    %727 = vmatpush1.msra.mxu0 %v685
    %728 = vmatprep.subr.mxu0 0.0
    %729 = vmatpush2.msra.mxu0 0.0
    %730 = vmatprep.subr.mxu0 0.0
    %731 = vmatpush2.msra.mxu0 0.0
    %732 = vmatprep.subr.mxu0 0.0
    %733 = vmatpush2.msra.mxu0 0.0
    %734 = vmatprep.subr.mxu0 0.0
    %735 = vmatpush2.msra.mxu0 0.0
    %736 = vmatprep.subr.mxu0 0.0
    %737 = vmatpush2.msra.mxu0 0.0
    %738 = vmatprep.subr.mxu0 0.0
    %739 = vmatpush2.msra.mxu0 0.0
    %740 = vmatprep.subr.mxu0 0.0
    %741 = vmatpush2.msra.mxu0 0.0
    %742 = vmatprep.subr.mxu0 0.0
    %743 = vmatpush2.msra.mxu0 0.0
    %744 = vmatprep.subr.mxu0 0.0
    %745 = vmatpush2.msra.mxu0 0.0
    %746 = vmatprep.subr.mxu0 0.0
    %747 = vmatpush2.msra.mxu0 0.0
    %748 = vmatprep.subr.mxu0 0.0
    %749 = vmatpush2.msra.mxu0 0.0
    %750 = vmatprep.subr.mxu0 0.0
    %751 = vmatpush2.msra.mxu0 0.0
    %752 = vmatprep.subr.mxu0 0.0
    %753 = vmatpush2.msra.mxu0 0.0
    %754 = vmatprep.subr.mxu0 0.0
    %755 = vmatpush2.msra.mxu0 0.0
    %756 = vmatprep.subr.mxu0 0.0
    %757 = vmatpush2.msra.mxu0 0.0
    %758 = vmatprep.subr.mxu0 0.0
    %759 = vmatpush2.msra.mxu0 0.0
    %760 = vmatprep.mubr.f32.mxu0 0.0
    %761 = vmatmul.mubr.f32.gmra.mxu0 %v694
    %v762 = vpop.f32.mrf.mxu0
    %v763 = vadd.f32 0.0, %v762
    %v764 = vpop.f32.mrf.mxu0
    %765 = vdwg.mxu0
    %v767 = vsel %vm364, %v674, 0
    %769 = vmatprep.subr.mxu0 0.0
    %770 = vmatpush1.msra.mxu0 0.0
    %771 = vmatprep.subr.mxu0 0.0
    %772 = vmatpush1.msra.mxu0 0.0
    %773 = vmatprep.subr.mxu0 0.0
    %774 = vmatpush1.msra.mxu0 0.0
    %775 = vmatprep.subr.mxu0 0.0
    %776 = vmatpush1.msra.mxu0 0.0
    %777 = vmatprep.subr.mxu0 0.0
    %778 = vmatpush1.msra.mxu0 0.0
    %779 = vmatprep.subr.mxu0 0.0
    %780 = vmatpush1.msra.mxu0 0.0
    %781 = vmatprep.subr.mxu0 0.0
    %782 = vmatpush1.msra.mxu0 0.0
    %783 = vmatprep.subr.mxu0 0.0
    %784 = vmatpush1.msra.mxu0 0.0
    %785 = vmatprep.subr.mxu0 0.0
    %786 = vmatpush1.msra.mxu0 %v684
    %787 = vmatprep.subr.mxu0 0.0
    %788 = vmatpush1.msra.mxu0 %v683
    %789 = vmatprep.subr.mxu0 0.0
    %790 = vmatpush1.msra.mxu0 %v682
    %791 = vmatprep.subr.mxu0 0.0
    %792 = vmatpush1.msra.mxu0 %v681
    %793 = vmatprep.subr.mxu0 0.0
    %794 = vmatpush1.msra.mxu0 %v680
    %795 = vmatprep.subr.mxu0 0.0
    %796 = vmatpush1.msra.mxu0 %v679
    %797 = vmatprep.subr.mxu0 0.0
    %798 = vmatpush1.msra.mxu0 %v678
    %799 = vmatprep.subr.mxu0 0.0
    %800 = vmatpush1.msra.mxu0 %v677
    %801 = vmatprep.subr.mxu0 0.0
    %802 = vmatpush2.msra.mxu0 0.0
    %803 = vmatprep.subr.mxu0 0.0
    %804 = vmatpush2.msra.mxu0 0.0
    %805 = vmatprep.subr.mxu0 0.0
    %806 = vmatpush2.msra.mxu0 0.0
    %807 = vmatprep.subr.mxu0 0.0
    %808 = vmatpush2.msra.mxu0 0.0
    %809 = vmatprep.subr.mxu0 0.0
    %810 = vmatpush2.msra.mxu0 0.0
    %811 = vmatprep.subr.mxu0 0.0
    %812 = vmatpush2.msra.mxu0 0.0
    %813 = vmatprep.subr.mxu0 0.0
    %814 = vmatpush2.msra.mxu0 0.0
    %815 = vmatprep.subr.mxu0 0.0
    %816 = vmatpush2.msra.mxu0 0.0
    %817 = vmatprep.subr.mxu0 0.0
    %818 = vmatpush2.msra.mxu0 0.0
    %819 = vmatprep.subr.mxu0 0.0
    %820 = vmatpush2.msra.mxu0 0.0
    %821 = vmatprep.subr.mxu0 0.0
    %822 = vmatpush2.msra.mxu0 0.0
    %823 = vmatprep.subr.mxu0 0.0
    %824 = vmatpush2.msra.mxu0 0.0
    %825 = vmatprep.subr.mxu0 0.0
    %826 = vmatpush2.msra.mxu0 0.0
    %827 = vmatprep.subr.mxu0 0.0
    %828 = vmatpush2.msra.mxu0 0.0
    %829 = vmatprep.subr.mxu0 0.0
    %830 = vmatpush2.msra.mxu0 0.0
    %831 = vmatprep.subr.mxu0 0.0
    %832 = vmatpush2.msra.mxu0 0.0
    %833 = vmatprep.mubr.f32.mxu0 0.0
    %834 = vmatmul.mubr.f32.gmra.mxu0 %v767
    %v835 = vpop.f32.mrf.mxu0
    %v836 = vadd.f32 %v763, %v835
    %v837 = vpop.f32.mrf.mxu0
    %838 = vdwg.mxu0
    %v839 = vld [vmem:[%s5 + $0x11] ss:$0 sm:$0xff]
    %v840 = vadd.f32 %v836, %v839
    %v841 = vmax.f32 %v840, 0.0
    %v842 = vld [vmem:[%s4 + $0x188] sm:$0xff]
    %v843 = vld [vmem:[%s4 + $0x190] sm:$0xff]
    %v844 = vld [vmem:[%s4 + $0x198] sm:$0xff]
    %v845 = vld [vmem:[%s4 + $0x1a0] sm:$0xff]
    %v846 = vld [vmem:[%s4 + $0x1a8] sm:$0xff]
    %v847 = vld [vmem:[%s4 + $0x1b0] sm:$0xff]
    %v848 = vld [vmem:[%s4 + $0x1b8] sm:$0xff]
    %v849 = vld [vmem:[%s4 + $0x1c0] sm:$0xff]
    %v850 = vld [vmem:[%s5 + $0x12] ss:$0 sm:$0xff]
    %v852 = vsel %vm364, %v841, 0
    %854 = vmatprep.subr.mxu0 0.0
    %855 = vmatpush1.msra.mxu0 0.0
    %856 = vmatprep.subr.mxu0 0.0
    %857 = vmatpush1.msra.mxu0 0.0
    %858 = vmatprep.subr.mxu0 0.0
    %859 = vmatpush1.msra.mxu0 0.0
    %860 = vmatprep.subr.mxu0 0.0
    %861 = vmatpush1.msra.mxu0 0.0
    %862 = vmatprep.subr.mxu0 0.0
    %863 = vmatpush1.msra.mxu0 0.0
    %864 = vmatprep.subr.mxu0 0.0
    %865 = vmatpush1.msra.mxu0 0.0
    %866 = vmatprep.subr.mxu0 0.0
    %867 = vmatpush1.msra.mxu0 0.0
    %868 = vmatprep.subr.mxu0 0.0
    %869 = vmatpush1.msra.mxu0 0.0
    %870 = vmatprep.subr.mxu0 0.0
    %871 = vmatpush1.msra.mxu0 %v849
    %872 = vmatprep.subr.mxu0 0.0
    %873 = vmatpush1.msra.mxu0 %v848
    %874 = vmatprep.subr.mxu0 0.0
    %875 = vmatpush1.msra.mxu0 %v847
    %876 = vmatprep.subr.mxu0 0.0
    %877 = vmatpush1.msra.mxu0 %v846
    %878 = vmatprep.subr.mxu0 0.0
    %879 = vmatpush1.msra.mxu0 %v845
    %880 = vmatprep.subr.mxu0 0.0
    %881 = vmatpush1.msra.mxu0 %v844
    %882 = vmatprep.subr.mxu0 0.0
    %883 = vmatpush1.msra.mxu0 %v843
    %884 = vmatprep.subr.mxu0 0.0
    %885 = vmatpush1.msra.mxu0 %v842
    %886 = vmatprep.subr.mxu0 0.0
    %887 = vmatpush2.msra.mxu0 0.0
    %888 = vmatprep.subr.mxu0 0.0
    %889 = vmatpush2.msra.mxu0 0.0
    %890 = vmatprep.subr.mxu0 0.0
    %891 = vmatpush2.msra.mxu0 0.0
    %892 = vmatprep.subr.mxu0 0.0
    %893 = vmatpush2.msra.mxu0 0.0
    %894 = vmatprep.subr.mxu0 0.0
    %895 = vmatpush2.msra.mxu0 0.0
    %896 = vmatprep.subr.mxu0 0.0
    %897 = vmatpush2.msra.mxu0 0.0
    %898 = vmatprep.subr.mxu0 0.0
    %899 = vmatpush2.msra.mxu0 0.0
    %900 = vmatprep.subr.mxu0 0.0
    %901 = vmatpush2.msra.mxu0 0.0
    %902 = vmatprep.subr.mxu0 0.0
    %903 = vmatpush2.msra.mxu0 0.0
    %904 = vmatprep.subr.mxu0 0.0
    %905 = vmatpush2.msra.mxu0 0.0
    %906 = vmatprep.subr.mxu0 0.0
    %907 = vmatpush2.msra.mxu0 0.0
    %908 = vmatprep.subr.mxu0 0.0
    %909 = vmatpush2.msra.mxu0 0.0
    %910 = vmatprep.subr.mxu0 0.0
    %911 = vmatpush2.msra.mxu0 0.0
    %912 = vmatprep.subr.mxu0 0.0
    %913 = vmatpush2.msra.mxu0 0.0
    %914 = vmatprep.subr.mxu0 0.0
    %915 = vmatpush2.msra.mxu0 0.0
    %916 = vmatprep.subr.mxu0 0.0
    %917 = vmatpush2.msra.mxu0 0.0
    %918 = vmatprep.mubr.f32.mxu0 0.0
    %919 = vmatmul.mubr.f32.gmra.mxu0 %v852
    %v920 = vpop.f32.mrf.mxu0
    %v921 = vadd.f32 %v850, %v920
    %v922 = vpop.f32.mrf.mxu0
    %923 = vdwg.mxu0
    %v924 = vld [vmem:[%s0] sm:$0xff]
    %v925 = vld [vmem:[%s0 + $0x8] sm:$0xff]
    %v926 = vld [vmem:[%s2] sm:$0xff]
    %v927 = vld [vmem:[%s2 + $0x8] sm:$0xff]
    %v928 = vld [vmem:[%s2 + $0x10] sm:$0xff]
    %v929 = vld [vmem:[%s2 + $0x18] sm:$0xff]
    %v930 = vld [vmem:[%s2 + $0x20] sm:$0xff]
    %v931 = vld [vmem:[%s2 + $0x28] sm:$0xff]
    %v932 = vld [vmem:[%s2 + $0x30] sm:$0xff]
    %v933 = vld [vmem:[%s2 + $0x38] sm:$0xff]
    %v934 = vld [vmem:[%s2 + $0x40] sm:$0xff]
    %v935 = vld [vmem:[%s2 + $0x48] sm:$0xff]
    %v936 = vld [vmem:[%s2 + $0x50] sm:$0xff]
    %v937 = vld [vmem:[%s2 + $0x58] sm:$0xff]
    %v938 = vld [vmem:[%s2 + $0x60] sm:$0xff]
    %v939 = vld [vmem:[%s2 + $0x68] sm:$0xff]
    %v940 = vld [vmem:[%s2 + $0x70] sm:$0xff]
    %v941 = vld [vmem:[%s2 + $0x78] sm:$0xff]
    %v942 = vld [vmem:[%s2 + $0x80] sm:$0xff]
    %v943 = vld [vmem:[%s2 + $0x88] sm:$0xff]
    %v944 = vld [vmem:[%s2 + $0x90] sm:$0xff]
    %v945 = vld [vmem:[%s2 + $0x98] sm:$0xff]
    %v946 = vld [vmem:[%s2 + $0xa0] sm:$0xff]
    %v947 = vld [vmem:[%s2 + $0xa8] sm:$0xff]
    %v948 = vld [vmem:[%s2 + $0xb0] sm:$0xff]
    %v949 = vld [vmem:[%s2 + $0xb8] sm:$0xff]
    %v950 = vld [vmem:[%s2 + $0xc0] sm:$0xff]
    %v951 = vld [vmem:[%s2 + $0xc8] sm:$0xff]
    %v952 = vld [vmem:[%s2 + $0xd0] sm:$0xff]
    %v953 = vld [vmem:[%s2 + $0xd8] sm:$0xff]
    %v954 = vld [vmem:[%s2 + $0xe0] sm:$0xff]
    %v955 = vld [vmem:[%s2 + $0xe8] sm:$0xff]
    %v956 = vld [vmem:[%s2 + $0xf0] sm:$0xff]
    %v957 = vld [vmem:[%s2 + $0xf8] sm:$0xff]
    %v958 = vld [vmem:[%s5] ss:$8 sm:$0x3]
    %v960 = vlaneseq
    %v961 = vshrl.u32 %v960, 7
    %v962 = vsub.s32 0, %v961
    %v963 = vrot.slane %v958, %v962
    %v964 = vlaneseq
    %v965 = vshrl.u32 %v964, 7
    %v966 = vsub.s32 1, %v965
    %v967 = vrot.slane %v958, %v966
    %v972 = vunpack.c.l.b16 %v924
    %v973 = vunpack.c.h.b16 %v924
    %v974 = vunpack.c.l.b16 %v925
    %v975 = vunpack.c.h.b16 %v925
    %v976 = vpack.c.b16 %v974, %v972
    %v977 = vpack.c.b16 %v975, %v973
    %v1012 = vunpack.c.l.b16 %v926
    %v1013 = vunpack.c.h.b16 %v926
    %v1014 = vunpack.c.l.b16 %v927
    %v1015 = vunpack.c.h.b16 %v927
    %v1016 = vunpack.c.l.b16 %v928
    %v1017 = vunpack.c.h.b16 %v928
    %v1018 = vunpack.c.l.b16 %v929
    %v1019 = vunpack.c.h.b16 %v929
    %v1020 = vunpack.c.l.b16 %v930
    %v1021 = vunpack.c.h.b16 %v930
    %v1022 = vunpack.c.l.b16 %v931
    %v1023 = vunpack.c.h.b16 %v931
    %v1024 = vunpack.c.l.b16 %v932
    %v1025 = vunpack.c.h.b16 %v932
    %v1026 = vunpack.c.l.b16 %v933
    %v1027 = vunpack.c.h.b16 %v933
    %v1028 = vunpack.c.l.b16 %v934
    %v1029 = vunpack.c.h.b16 %v934
    %v1030 = vunpack.c.l.b16 %v935
    %v1031 = vunpack.c.h.b16 %v935
    %v1032 = vunpack.c.l.b16 %v936
    %v1033 = vunpack.c.h.b16 %v936
    %v1034 = vunpack.c.l.b16 %v937
    %v1035 = vunpack.c.h.b16 %v937
    %v1036 = vunpack.c.l.b16 %v938
    %v1037 = vunpack.c.h.b16 %v938
    %v1038 = vunpack.c.l.b16 %v939
    %v1039 = vunpack.c.h.b16 %v939
    %v1040 = vunpack.c.l.b16 %v940
    %v1041 = vunpack.c.h.b16 %v940
    %v1042 = vunpack.c.l.b16 %v941
    %v1043 = vunpack.c.h.b16 %v941
    %v1044 = vunpack.c.l.b16 %v942
    %v1045 = vunpack.c.h.b16 %v942
    %v1046 = vunpack.c.l.b16 %v943
    %v1047 = vunpack.c.h.b16 %v943
    %v1048 = vunpack.c.l.b16 %v944
    %v1049 = vunpack.c.h.b16 %v944
    %v1050 = vunpack.c.l.b16 %v945
    %v1051 = vunpack.c.h.b16 %v945
    %v1052 = vunpack.c.l.b16 %v946
    %v1053 = vunpack.c.h.b16 %v946
    %v1054 = vunpack.c.l.b16 %v947
    %v1055 = vunpack.c.h.b16 %v947
    %v1056 = vunpack.c.l.b16 %v948
    %v1057 = vunpack.c.h.b16 %v948
    %v1058 = vunpack.c.l.b16 %v949
    %v1059 = vunpack.c.h.b16 %v949
    %v1060 = vunpack.c.l.b16 %v950
    %v1061 = vunpack.c.h.b16 %v950
    %v1062 = vunpack.c.l.b16 %v951
    %v1063 = vunpack.c.h.b16 %v951
    %v1064 = vunpack.c.l.b16 %v952
    %v1065 = vunpack.c.h.b16 %v952
    %v1066 = vunpack.c.l.b16 %v953
    %v1067 = vunpack.c.h.b16 %v953
    %v1068 = vunpack.c.l.b16 %v954
    %v1069 = vunpack.c.h.b16 %v954
    %v1070 = vunpack.c.l.b16 %v955
    %v1071 = vunpack.c.h.b16 %v955
    %v1072 = vunpack.c.l.b16 %v956
    %v1073 = vunpack.c.h.b16 %v956
    %v1074 = vunpack.c.l.b16 %v957
    %v1075 = vunpack.c.h.b16 %v957
    %v1076 = vpack.c.b16 %v1014, %v1012
    %v1077 = vpack.c.b16 %v1015, %v1013
    %v1078 = vpack.c.b16 %v1018, %v1016
    %v1079 = vpack.c.b16 %v1019, %v1017
    %v1080 = vpack.c.b16 %v1022, %v1020
    %v1081 = vpack.c.b16 %v1023, %v1021
    %v1082 = vpack.c.b16 %v1026, %v1024
    %v1083 = vpack.c.b16 %v1027, %v1025
    %v1084 = vpack.c.b16 %v1030, %v1028
    %v1085 = vpack.c.b16 %v1031, %v1029
    %v1086 = vpack.c.b16 %v1034, %v1032
    %v1087 = vpack.c.b16 %v1035, %v1033
    %v1088 = vpack.c.b16 %v1038, %v1036
    %v1089 = vpack.c.b16 %v1039, %v1037
    %v1090 = vpack.c.b16 %v1042, %v1040
    %v1091 = vpack.c.b16 %v1043, %v1041
    %v1092 = vpack.c.b16 %v1046, %v1044
    %v1093 = vpack.c.b16 %v1047, %v1045
    %v1094 = vpack.c.b16 %v1050, %v1048
    %v1095 = vpack.c.b16 %v1051, %v1049
    %v1096 = vpack.c.b16 %v1054, %v1052
    %v1097 = vpack.c.b16 %v1055, %v1053
    %v1098 = vpack.c.b16 %v1058, %v1056
    %v1099 = vpack.c.b16 %v1059, %v1057
    %v1100 = vpack.c.b16 %v1062, %v1060
    %v1101 = vpack.c.b16 %v1063, %v1061
    %v1102 = vpack.c.b16 %v1066, %v1064
    %v1103 = vpack.c.b16 %v1067, %v1065
    %v1104 = vpack.c.b16 %v1070, %v1068
    %v1105 = vpack.c.b16 %v1071, %v1069
    %v1106 = vpack.c.b16 %v1074, %v1072
    %v1107 = vpack.c.b16 %v1075, %v1073
    %1140 = vmatprep.subr.bf16.mxu0 %v1091
    %1141 = vmatpush1.bf16.msra.mxu0 %v1090
    %1142 = vmatprep.subr.bf16.mxu0 %v1089
    %1143 = vmatpush1.bf16.msra.mxu0 %v1088
    %1144 = vmatprep.subr.bf16.mxu0 %v1087
    %1145 = vmatpush1.bf16.msra.mxu0 %v1086
    %1146 = vmatprep.subr.bf16.mxu0 %v1085
    %1147 = vmatpush1.bf16.msra.mxu0 %v1084
    %1148 = vmatprep.subr.bf16.mxu0 %v1083
    %1149 = vmatpush1.bf16.msra.mxu0 %v1082
    %1150 = vmatprep.subr.bf16.mxu0 %v1081
    %1151 = vmatpush1.bf16.msra.mxu0 %v1080
    %1152 = vmatprep.subr.bf16.mxu0 %v1079
    %1153 = vmatpush1.bf16.msra.mxu0 %v1078
    %1154 = vmatprep.subr.bf16.mxu0 %v1077
    %1155 = vmatpush1.bf16.msra.mxu0 %v1076
    %1156 = vmatprep.subr.bf16.mxu0 %v1107
    %1157 = vmatpush2.bf16.msra.mxu0 %v1106
    %1158 = vmatprep.subr.bf16.mxu0 %v1105
    %1159 = vmatpush2.bf16.msra.mxu0 %v1104
    %1160 = vmatprep.subr.bf16.mxu0 %v1103
    %1161 = vmatpush2.bf16.msra.mxu0 %v1102
    %1162 = vmatprep.subr.bf16.mxu0 %v1101
    %1163 = vmatpush2.bf16.msra.mxu0 %v1100
    %1164 = vmatprep.subr.bf16.mxu0 %v1099
    %1165 = vmatpush2.bf16.msra.mxu0 %v1098
    %1166 = vmatprep.subr.bf16.mxu0 %v1097
    %1167 = vmatpush2.bf16.msra.mxu0 %v1096
    %1168 = vmatprep.subr.bf16.mxu0 %v1095
    %1169 = vmatpush2.bf16.msra.mxu0 %v1094
    %1170 = vmatprep.subr.bf16.mxu0 %v1093
    %1171 = vmatpush2.bf16.msra.mxu0 %v1092
    %1172 = vmatprep.mubr.bf16.mxu0 %v977
    %1173 = vmatmul.mubr.bf16.gmra.mxu0 %v976
    %v1174 = vpop.f32.mrf.mxu0
    %v1175 = vadd.f32 %v963, %v1174
    %v1176 = vpop.f32.mrf.mxu0
    %v1177 = vadd.f32 %v967, %v1176
    %v1178 = vpop.f32.mrf.mxu0
    %v1179 = vadd.f32 %v963, %v1178
    %v1180 = vpop.f32.mrf.mxu0
    %v1181 = vadd.f32 %v967, %v1180
    %1182 = vdwg.mxu0
    %v1183 = vld [vmem:[%s3] sm:$0xff]
    %v1184 = vld [vmem:[%s3 + $0x8] sm:$0xff]
    %v1185 = vld [vmem:[%s3 + $0x10] sm:$0xff]
    %v1186 = vld [vmem:[%s3 + $0x18] sm:$0xff]
    %v1187 = vld [vmem:[%s3 + $0x20] sm:$0xff]
    %v1188 = vld [vmem:[%s3 + $0x28] sm:$0xff]
    %v1189 = vld [vmem:[%s3 + $0x30] sm:$0xff]
    %v1190 = vld [vmem:[%s3 + $0x38] sm:$0xff]
    %v1191 = vld [vmem:[%s5 + $0x1] ss:$0 sm:$0xff]
    %v1192 = vpack.c.bf16 %v921, %v921
    %v1201 = vunpack.c.l.b16 %v1183
    %v1202 = vunpack.c.h.b16 %v1183
    %v1203 = vunpack.c.l.b16 %v1184
    %v1204 = vunpack.c.h.b16 %v1184
    %v1205 = vunpack.c.l.b16 %v1185
    %v1206 = vunpack.c.h.b16 %v1185
    %v1207 = vunpack.c.l.b16 %v1186
    %v1208 = vunpack.c.h.b16 %v1186
    %v1209 = vunpack.c.l.b16 %v1187
    %v1210 = vunpack.c.h.b16 %v1187
    %v1211 = vunpack.c.l.b16 %v1188
    %v1212 = vunpack.c.h.b16 %v1188
    %v1213 = vunpack.c.l.b16 %v1189
    %v1214 = vunpack.c.h.b16 %v1189
    %v1215 = vunpack.c.l.b16 %v1190
    %v1216 = vunpack.c.h.b16 %v1190
    %v1217 = vpack.c.b16 %v1203, %v1201
    %v1218 = vpack.c.b16 %v1204, %v1202
    %v1219 = vpack.c.b16 %v1207, %v1205
    %v1220 = vpack.c.b16 %v1208, %v1206
    %v1221 = vpack.c.b16 %v1211, %v1209
    %v1222 = vpack.c.b16 %v1212, %v1210
    %v1223 = vpack.c.b16 %v1215, %v1213
    %v1224 = vpack.c.b16 %v1216, %v1214
    %v1234 = vsel %vm364, %v1192, 0
    %1236 = vmatprep.subr.bf16.mxu0 0
    %1237 = vmatpush1.bf16.msra.mxu0 0
    %1238 = vmatprep.subr.bf16.mxu0 0
    %1239 = vmatpush1.bf16.msra.mxu0 0
    %1240 = vmatprep.subr.bf16.mxu0 0
    %1241 = vmatpush1.bf16.msra.mxu0 0
    %1242 = vmatprep.subr.bf16.mxu0 0
    %1243 = vmatpush1.bf16.msra.mxu0 0
    %1244 = vmatprep.subr.bf16.mxu0 %v1224
    %1245 = vmatpush1.bf16.msra.mxu0 %v1223
    %1246 = vmatprep.subr.bf16.mxu0 %v1222
    %1247 = vmatpush1.bf16.msra.mxu0 %v1221
    %1248 = vmatprep.subr.bf16.mxu0 %v1220
    %1249 = vmatpush1.bf16.msra.mxu0 %v1219
    %1250 = vmatprep.subr.bf16.mxu0 %v1218
    %1251 = vmatpush1.bf16.msra.mxu0 %v1217
    %1252 = vmatprep.subr.bf16.mxu0 0
    %1253 = vmatpush2.bf16.msra.mxu0 0
    %1254 = vmatprep.subr.bf16.mxu0 0
    %1255 = vmatpush2.bf16.msra.mxu0 0
    %1256 = vmatprep.subr.bf16.mxu0 0
    %1257 = vmatpush2.bf16.msra.mxu0 0
    %1258 = vmatprep.subr.bf16.mxu0 0
    %1259 = vmatpush2.bf16.msra.mxu0 0
    %1260 = vmatprep.subr.bf16.mxu0 0
    %1261 = vmatpush2.bf16.msra.mxu0 0
    %1262 = vmatprep.subr.bf16.mxu0 0
    %1263 = vmatpush2.bf16.msra.mxu0 0
    %1264 = vmatprep.subr.bf16.mxu0 0
    %1265 = vmatpush2.bf16.msra.mxu0 0
    %1266 = vmatprep.subr.bf16.mxu0 0
    %1267 = vmatpush2.bf16.msra.mxu0 0
    %1268 = vmatprep.mubr.bf16.mxu0 0
    %1269 = vmatmul.mubr.bf16.gmra.mxu0 %v1234
    %v1270 = vpop.f32.mrf.mxu0
    %v1271 = vadd.f32 0.0, %v1270
    %v1272 = vpop.f32.mrf.mxu0
    %v1273 = vadd.f32 0.0, %v1272
    %v1274 = vpop.f32.mrf.mxu0
    %v1275 = vpop.f32.mrf.mxu0
    %1276 = vdwg.mxu0
    %v1277 = vadd.f32 %v1175, %v1271
    %v1278 = vxor.u32 %v1277, 2147483648
    %v1279 = vmul.f32 %v1278, 1.442695
    %v1280 = vpow.pop %v1279
    %v1281 = vadd.f32 %v1280, 1.0
    %v1282 = vrcp.pop %v1281
    %v1283 = vmul.f32 1.0, %v1282
    %v1284 = vadd.f32 %v1273, %v1191
    %v1285 = vmul.f32 %v1283, %v1284
    %v1286 = vadd.f32 %v1177, %v1285
    %v1287 = vtanh.pop %v1286
    %v1288 = vsub.f32 1.0, %v1283
    %1290 = vrot.lane.b32.xlu0 %v1287, 64
    %v1291 = vpop.permute.xlu0 %1290
    %v1293 = vmul.f32 %v1288, %v1291
    %1295 = vrot.lane.b32.xlu0 %v921, 64
    %v1296 = vpop.permute.xlu0 %1295
    %v1298 = vmul.f32 %v1283, %v1296
    %v1299 = vadd.f32 %v1293, %v1298
    %v1300 = vpack.c.bf16 %v1299, %v1299
    %1302 = vrot.lane.b32.xlu0 %v1300, 64
    %v1303 = vpop.permute.xlu0 %1302
    %v1305 = vsel %vm364, %v1303, 0
    %1307 = vmatprep.subr.bf16.mxu0 0
    %1308 = vmatpush1.bf16.msra.mxu0 0
    %1309 = vmatprep.subr.bf16.mxu0 0
    %1310 = vmatpush1.bf16.msra.mxu0 0
    %1311 = vmatprep.subr.bf16.mxu0 0
    %1312 = vmatpush1.bf16.msra.mxu0 0
    %1313 = vmatprep.subr.bf16.mxu0 0
    %1314 = vmatpush1.bf16.msra.mxu0 0
    %1315 = vmatprep.subr.bf16.mxu0 %v1224
    %1316 = vmatpush1.bf16.msra.mxu0 %v1223
    %1317 = vmatprep.subr.bf16.mxu0 %v1222
    %1318 = vmatpush1.bf16.msra.mxu0 %v1221
    %1319 = vmatprep.subr.bf16.mxu0 %v1220
    %1320 = vmatpush1.bf16.msra.mxu0 %v1219
    %1321 = vmatprep.subr.bf16.mxu0 %v1218
    %1322 = vmatpush1.bf16.msra.mxu0 %v1217
    %1323 = vmatprep.subr.bf16.mxu0 0
    %1324 = vmatpush2.bf16.msra.mxu0 0
    %1325 = vmatprep.subr.bf16.mxu0 0
    %1326 = vmatpush2.bf16.msra.mxu0 0
    %1327 = vmatprep.subr.bf16.mxu0 0
    %1328 = vmatpush2.bf16.msra.mxu0 0
    %1329 = vmatprep.subr.bf16.mxu0 0
    %1330 = vmatpush2.bf16.msra.mxu0 0
    %1331 = vmatprep.subr.bf16.mxu0 0
    %1332 = vmatpush2.bf16.msra.mxu0 0
    %1333 = vmatprep.subr.bf16.mxu0 0
    %1334 = vmatpush2.bf16.msra.mxu0 0
    %1335 = vmatprep.subr.bf16.mxu0 0
    %1336 = vmatpush2.bf16.msra.mxu0 0
    %1337 = vmatprep.subr.bf16.mxu0 0
    %1338 = vmatpush2.bf16.msra.mxu0 0
    %1339 = vmatprep.mubr.bf16.mxu0 0
    %1340 = vmatmul.mubr.bf16.gmra.mxu0 %v1305
    %v1341 = vpop.f32.mrf.mxu0
    %v1342 = vadd.f32 0.0, %v1341
    %v1343 = vpop.f32.mrf.mxu0
    %v1344 = vadd.f32 0.0, %v1343
    %v1345 = vpop.f32.mrf.mxu0
    %v1346 = vpop.f32.mrf.mxu0
    %1347 = vdwg.mxu0
    %v1349 = vrot.slane %v1342, 6
    %v1351 = vadd.f32 %v1175, %v1349
    %v1352 = vxor.u32 %v1351, 2147483648
    %v1353 = vmul.f32 %v1352, 1.442695
    %v1354 = vpow.pop %v1353
    %v1355 = vadd.f32 %v1354, 1.0
    %v1356 = vrcp.pop %v1355
    %v1357 = vmul.f32 1.0, %v1356
    %v1358 = vadd.f32 %v1344, %v1191
    %v1360 = vrot.slane %v1358, 6
    %v1362 = vmul.f32 %v1357, %v1360
    %v1363 = vadd.f32 %v1177, %v1362
    %v1364 = vtanh.pop %v1363
    %v1365 = vsub.f32 1.0, %v1357
    %1367 = vrot.lane.b32.xlu0 %v1364, 64
    %v1368 = vpop.permute.xlu0 %1367
    %v1370 = vmul.f32 %v1365, %v1368
    %v1372 = vrot.slane %v1299, 6
    %v1374 = vmul.f32 %v1357, %v1372
    %v1375 = vadd.f32 %v1370, %v1374
    %v1376 = vpack.c.bf16 %v1375, %v1375
    %v1378 = vrot.slane %v1376, 1
    %1379 = vrot.lane.b32.xlu0 %v1378, 64
    %v1380 = vpop.permute.xlu0 %1379
    %v1382 = vsel %vm364, %v1380, 0
    %1384 = vmatprep.subr.bf16.mxu0 0
    %1385 = vmatpush1.bf16.msra.mxu0 0
    %1386 = vmatprep.subr.bf16.mxu0 0
    %1387 = vmatpush1.bf16.msra.mxu0 0
    %1388 = vmatprep.subr.bf16.mxu0 0
    %1389 = vmatpush1.bf16.msra.mxu0 0
    %1390 = vmatprep.subr.bf16.mxu0 0
    %1391 = vmatpush1.bf16.msra.mxu0 0
    %1392 = vmatprep.subr.bf16.mxu0 %v1224
    %1393 = vmatpush1.bf16.msra.mxu0 %v1223
    %1394 = vmatprep.subr.bf16.mxu0 %v1222
    %1395 = vmatpush1.bf16.msra.mxu0 %v1221
    %1396 = vmatprep.subr.bf16.mxu0 %v1220
    %1397 = vmatpush1.bf16.msra.mxu0 %v1219
    %1398 = vmatprep.subr.bf16.mxu0 %v1218
    %1399 = vmatpush1.bf16.msra.mxu0 %v1217
    %1400 = vmatprep.subr.bf16.mxu0 0
    %1401 = vmatpush2.bf16.msra.mxu0 0
    %1402 = vmatprep.subr.bf16.mxu0 0
    %1403 = vmatpush2.bf16.msra.mxu0 0
    %1404 = vmatprep.subr.bf16.mxu0 0
    %1405 = vmatpush2.bf16.msra.mxu0 0
    %1406 = vmatprep.subr.bf16.mxu0 0
    %1407 = vmatpush2.bf16.msra.mxu0 0
    %1408 = vmatprep.subr.bf16.mxu0 0
    %1409 = vmatpush2.bf16.msra.mxu0 0
    %1410 = vmatprep.subr.bf16.mxu0 0
    %1411 = vmatpush2.bf16.msra.mxu0 0
    %1412 = vmatprep.subr.bf16.mxu0 0
    %1413 = vmatpush2.bf16.msra.mxu0 0
    %1414 = vmatprep.subr.bf16.mxu0 0
    %1415 = vmatpush2.bf16.msra.mxu0 0
    %1416 = vmatprep.mubr.bf16.mxu0 0
    %1417 = vmatmul.mubr.bf16.gmra.mxu0 %v1382
    %v1418 = vpop.f32.mrf.mxu0
    %v1419 = vadd.f32 0.0, %v1418
    %v1420 = vpop.f32.mrf.mxu0
    %v1421 = vadd.f32 0.0, %v1420
    %v1422 = vpop.f32.mrf.mxu0
    %v1423 = vpop.f32.mrf.mxu0
    %1424 = vdwg.mxu0
    %v1426 = vrot.slane %v1419, 4
    %v1428 = vadd.f32 %v1175, %v1426
    %v1429 = vxor.u32 %v1428, 2147483648
    %v1430 = vmul.f32 %v1429, 1.442695
    %v1431 = vpow.pop %v1430
    %v1432 = vadd.f32 %v1431, 1.0
    %v1433 = vrcp.pop %v1432
    %v1434 = vmul.f32 1.0, %v1433
    %v1435 = vadd.f32 %v1421, %v1191
    %v1437 = vrot.slane %v1435, 4
    %v1439 = vmul.f32 %v1434, %v1437
    %v1440 = vadd.f32 %v1177, %v1439
    %v1441 = vtanh.pop %v1440
    %v1442 = vsub.f32 1.0, %v1434
    %1444 = vrot.lane.b32.xlu0 %v1441, 64
    %v1445 = vpop.permute.xlu0 %1444
    %v1447 = vmul.f32 %v1442, %v1445
    %v1449 = vrot.slane %v1375, 6
    %v1451 = vmul.f32 %v1434, %v1449
    %v1452 = vadd.f32 %v1447, %v1451
    %v1453 = vpack.c.bf16 %v1452, %v1452
    %v1455 = vrot.slane %v1453, 2
    %1456 = vrot.lane.b32.xlu0 %v1455, 64
    %v1457 = vpop.permute.xlu0 %1456
    %v1459 = vsel %vm364, %v1457, 0
    %1461 = vmatprep.subr.bf16.mxu0 0
    %1462 = vmatpush1.bf16.msra.mxu0 0
    %1463 = vmatprep.subr.bf16.mxu0 0
    %1464 = vmatpush1.bf16.msra.mxu0 0
    %1465 = vmatprep.subr.bf16.mxu0 0
    %1466 = vmatpush1.bf16.msra.mxu0 0
    %1467 = vmatprep.subr.bf16.mxu0 0
    %1468 = vmatpush1.bf16.msra.mxu0 0
    %1469 = vmatprep.subr.bf16.mxu0 %v1224
    %1470 = vmatpush1.bf16.msra.mxu0 %v1223
    %1471 = vmatprep.subr.bf16.mxu0 %v1222
    %1472 = vmatpush1.bf16.msra.mxu0 %v1221
    %1473 = vmatprep.subr.bf16.mxu0 %v1220
    %1474 = vmatpush1.bf16.msra.mxu0 %v1219
    %1475 = vmatprep.subr.bf16.mxu0 %v1218
    %1476 = vmatpush1.bf16.msra.mxu0 %v1217
    %1477 = vmatprep.subr.bf16.mxu0 0
    %1478 = vmatpush2.bf16.msra.mxu0 0
    %1479 = vmatprep.subr.bf16.mxu0 0
    %1480 = vmatpush2.bf16.msra.mxu0 0
    %1481 = vmatprep.subr.bf16.mxu0 0
    %1482 = vmatpush2.bf16.msra.mxu0 0
    %1483 = vmatprep.subr.bf16.mxu0 0
    %1484 = vmatpush2.bf16.msra.mxu0 0
    %1485 = vmatprep.subr.bf16.mxu0 0
    %1486 = vmatpush2.bf16.msra.mxu0 0
    %1487 = vmatprep.subr.bf16.mxu0 0
    %1488 = vmatpush2.bf16.msra.mxu0 0
    %1489 = vmatprep.subr.bf16.mxu0 0
    %1490 = vmatpush2.bf16.msra.mxu0 0
    %1491 = vmatprep.subr.bf16.mxu0 0
    %1492 = vmatpush2.bf16.msra.mxu0 0
    %1493 = vmatprep.mubr.bf16.mxu0 0
    %1494 = vmatmul.mubr.bf16.gmra.mxu0 %v1459
    %v1495 = vpop.f32.mrf.mxu0
    %v1496 = vadd.f32 0.0, %v1495
    %v1497 = vpop.f32.mrf.mxu0
    %v1498 = vadd.f32 0.0, %v1497
    %v1499 = vpop.f32.mrf.mxu0
    %v1500 = vpop.f32.mrf.mxu0
    %1501 = vdwg.mxu0
    %v1503 = vrot.slane %v1496, 2
    %v1505 = vadd.f32 %v1175, %v1503
    %v1506 = vxor.u32 %v1505, 2147483648
    %v1507 = vmul.f32 %v1506, 1.442695
    %v1508 = vpow.pop %v1507
    %v1509 = vadd.f32 %v1508, 1.0
    %v1510 = vrcp.pop %v1509
    %v1511 = vmul.f32 1.0, %v1510
    %v1512 = vadd.f32 %v1498, %v1191
    %v1514 = vrot.slane %v1512, 2
    %v1516 = vmul.f32 %v1511, %v1514
    %v1517 = vadd.f32 %v1177, %v1516
    %v1518 = vtanh.pop %v1517
    %v1519 = vsub.f32 1.0, %v1511
    %1521 = vrot.lane.b32.xlu0 %v1518, 64
    %v1522 = vpop.permute.xlu0 %1521
    %v1524 = vmul.f32 %v1519, %v1522
    %v1526 = vrot.slane %v1452, 6
    %v1528 = vmul.f32 %v1511, %v1526
    %v1529 = vadd.f32 %v1524, %v1528
    %v1530 = vpack.c.bf16 %v1529, %v1529
    %v1532 = vrot.slane %v1530, 3
    %1533 = vrot.lane.b32.xlu0 %v1532, 64
    %v1534 = vpop.permute.xlu0 %1533
    %v1536 = vsel %vm364, %v1534, 0
    %1538 = vmatprep.subr.bf16.mxu0 0
    %1539 = vmatpush1.bf16.msra.mxu0 0
    %1540 = vmatprep.subr.bf16.mxu0 0
    %1541 = vmatpush1.bf16.msra.mxu0 0
    %1542 = vmatprep.subr.bf16.mxu0 0
    %1543 = vmatpush1.bf16.msra.mxu0 0
    %1544 = vmatprep.subr.bf16.mxu0 0
    %1545 = vmatpush1.bf16.msra.mxu0 0
    %1546 = vmatprep.subr.bf16.mxu0 %v1224
    %1547 = vmatpush1.bf16.msra.mxu0 %v1223
    %1548 = vmatprep.subr.bf16.mxu0 %v1222
    %1549 = vmatpush1.bf16.msra.mxu0 %v1221
    %1550 = vmatprep.subr.bf16.mxu0 %v1220
    %1551 = vmatpush1.bf16.msra.mxu0 %v1219
    %1552 = vmatprep.subr.bf16.mxu0 %v1218
    %1553 = vmatpush1.bf16.msra.mxu0 %v1217
    %1554 = vmatprep.subr.bf16.mxu0 0
    %1555 = vmatpush2.bf16.msra.mxu0 0
    %1556 = vmatprep.subr.bf16.mxu0 0
    %1557 = vmatpush2.bf16.msra.mxu0 0
    %1558 = vmatprep.subr.bf16.mxu0 0
    %1559 = vmatpush2.bf16.msra.mxu0 0
    %1560 = vmatprep.subr.bf16.mxu0 0
    %1561 = vmatpush2.bf16.msra.mxu0 0
    %1562 = vmatprep.subr.bf16.mxu0 0
    %1563 = vmatpush2.bf16.msra.mxu0 0
    %1564 = vmatprep.subr.bf16.mxu0 0
    %1565 = vmatpush2.bf16.msra.mxu0 0
    %1566 = vmatprep.subr.bf16.mxu0 0
    %1567 = vmatpush2.bf16.msra.mxu0 0
    %1568 = vmatprep.subr.bf16.mxu0 0
    %1569 = vmatpush2.bf16.msra.mxu0 0
    %1570 = vmatprep.mubr.bf16.mxu0 0
    %1571 = vmatmul.mubr.bf16.gmra.mxu0 %v1536
    %v1572 = vpop.f32.mrf.mxu0
    %v1573 = vadd.f32 0.0, %v1572
    %v1574 = vpop.f32.mrf.mxu0
    %v1575 = vadd.f32 0.0, %v1574
    %v1576 = vpop.f32.mrf.mxu0
    %v1577 = vpop.f32.mrf.mxu0
    %1578 = vdwg.mxu0
    %v1579 = vadd.f32 %v1179, %v1573
    %v1580 = vxor.u32 %v1579, 2147483648
    %v1581 = vmul.f32 %v1580, 1.442695
    %v1582 = vpow.pop %v1581
    %v1583 = vadd.f32 %v1582, 1.0
    %v1584 = vrcp.pop %v1583
    %v1585 = vmul.f32 1.0, %v1584
    %v1586 = vadd.f32 %v1575, %v1191
    %v1587 = vmul.f32 %v1585, %v1586
    %v1588 = vadd.f32 %v1181, %v1587
    %v1589 = vtanh.pop %v1588
    %v1590 = vsub.f32 1.0, %v1585
    %1592 = vrot.lane.b32.xlu0 %v1589, 64
    %v1593 = vpop.permute.xlu0 %1592
    %v1595 = vmul.f32 %v1590, %v1593
    %v1597 = vrot.slane %v1529, 6
    %v1599 = vmul.f32 %v1585, %v1597
    %v1600 = vadd.f32 %v1595, %v1599
    %v1601 = vpack.c.bf16 %v1600, %v1600
    %1603 = vrot.lane.b32.xlu0 %v1601, 64
    %v1604 = vpop.permute.xlu0 %1603
    %v1606 = vsel %vm364, %v1604, 0
    %1608 = vmatprep.subr.bf16.mxu0 0
    %1609 = vmatpush1.bf16.msra.mxu0 0
    %1610 = vmatprep.subr.bf16.mxu0 0
    %1611 = vmatpush1.bf16.msra.mxu0 0
    %1612 = vmatprep.subr.bf16.mxu0 0
    %1613 = vmatpush1.bf16.msra.mxu0 0
    %1614 = vmatprep.subr.bf16.mxu0 0
    %1615 = vmatpush1.bf16.msra.mxu0 0
    %1616 = vmatprep.subr.bf16.mxu0 %v1224
    %1617 = vmatpush1.bf16.msra.mxu0 %v1223
    %1618 = vmatprep.subr.bf16.mxu0 %v1222
    %1619 = vmatpush1.bf16.msra.mxu0 %v1221
    %1620 = vmatprep.subr.bf16.mxu0 %v1220
    %1621 = vmatpush1.bf16.msra.mxu0 %v1219
    %1622 = vmatprep.subr.bf16.mxu0 %v1218
    %1623 = vmatpush1.bf16.msra.mxu0 %v1217
    %1624 = vmatprep.subr.bf16.mxu0 0
    %1625 = vmatpush2.bf16.msra.mxu0 0
    %1626 = vmatprep.subr.bf16.mxu0 0
    %1627 = vmatpush2.bf16.msra.mxu0 0
    %1628 = vmatprep.subr.bf16.mxu0 0
    %1629 = vmatpush2.bf16.msra.mxu0 0
    %1630 = vmatprep.subr.bf16.mxu0 0
    %1631 = vmatpush2.bf16.msra.mxu0 0
    %1632 = vmatprep.subr.bf16.mxu0 0
    %1633 = vmatpush2.bf16.msra.mxu0 0
    %1634 = vmatprep.subr.bf16.mxu0 0
    %1635 = vmatpush2.bf16.msra.mxu0 0
    %1636 = vmatprep.subr.bf16.mxu0 0
    %1637 = vmatpush2.bf16.msra.mxu0 0
    %1638 = vmatprep.subr.bf16.mxu0 0
    %1639 = vmatpush2.bf16.msra.mxu0 0
    %1640 = vmatprep.mubr.bf16.mxu0 0
    %1641 = vmatmul.mubr.bf16.gmra.mxu0 %v1606
    %v1642 = vpop.f32.mrf.mxu0
    %v1643 = vadd.f32 0.0, %v1642
    %v1644 = vpop.f32.mrf.mxu0
    %v1645 = vadd.f32 0.0, %v1644
    %v1646 = vpop.f32.mrf.mxu0
    %v1647 = vpop.f32.mrf.mxu0
    %1648 = vdwg.mxu0
    %v1650 = vrot.slane %v1643, 6
    %v1652 = vadd.f32 %v1179, %v1650
    %v1653 = vxor.u32 %v1652, 2147483648
    %v1654 = vmul.f32 %v1653, 1.442695
    %v1655 = vpow.pop %v1654
    %v1656 = vadd.f32 %v1655, 1.0
    %v1657 = vrcp.pop %v1656
    %v1658 = vmul.f32 1.0, %v1657
    %v1659 = vadd.f32 %v1645, %v1191
    %v1661 = vrot.slane %v1659, 6
    %v1663 = vmul.f32 %v1658, %v1661
    %v1664 = vadd.f32 %v1181, %v1663
    %v1665 = vtanh.pop %v1664
    %v1666 = vsub.f32 1.0, %v1658
    %1668 = vrot.lane.b32.xlu0 %v1665, 64
    %v1669 = vpop.permute.xlu0 %1668
    %v1671 = vmul.f32 %v1666, %v1669
    %v1673 = vrot.slane %v1600, 6
    %v1675 = vmul.f32 %v1658, %v1673
    %v1676 = vadd.f32 %v1671, %v1675
    %v1677 = vpack.c.bf16 %v1676, %v1676
    %v1679 = vrot.slane %v1677, 1
    %1680 = vrot.lane.b32.xlu0 %v1679, 64
    %v1681 = vpop.permute.xlu0 %1680
    %v1683 = vsel %vm364, %v1681, 0
    %1685 = vmatprep.subr.bf16.mxu0 0
    %1686 = vmatpush1.bf16.msra.mxu0 0
    %1687 = vmatprep.subr.bf16.mxu0 0
    %1688 = vmatpush1.bf16.msra.mxu0 0
    %1689 = vmatprep.subr.bf16.mxu0 0
    %1690 = vmatpush1.bf16.msra.mxu0 0
    %1691 = vmatprep.subr.bf16.mxu0 0
    %1692 = vmatpush1.bf16.msra.mxu0 0
    %1693 = vmatprep.subr.bf16.mxu0 %v1224
    %1694 = vmatpush1.bf16.msra.mxu0 %v1223
    %1695 = vmatprep.subr.bf16.mxu0 %v1222
    %1696 = vmatpush1.bf16.msra.mxu0 %v1221
    %1697 = vmatprep.subr.bf16.mxu0 %v1220
    %1698 = vmatpush1.bf16.msra.mxu0 %v1219
    %1699 = vmatprep.subr.bf16.mxu0 %v1218
    %1700 = vmatpush1.bf16.msra.mxu0 %v1217
    %1701 = vmatprep.subr.bf16.mxu0 0
    %1702 = vmatpush2.bf16.msra.mxu0 0
    %1703 = vmatprep.subr.bf16.mxu0 0
    %1704 = vmatpush2.bf16.msra.mxu0 0
    %1705 = vmatprep.subr.bf16.mxu0 0
    %1706 = vmatpush2.bf16.msra.mxu0 0
    %1707 = vmatprep.subr.bf16.mxu0 0
    %1708 = vmatpush2.bf16.msra.mxu0 0
    %1709 = vmatprep.subr.bf16.mxu0 0
    %1710 = vmatpush2.bf16.msra.mxu0 0
    %1711 = vmatprep.subr.bf16.mxu0 0
    %1712 = vmatpush2.bf16.msra.mxu0 0
    %1713 = vmatprep.subr.bf16.mxu0 0
    %1714 = vmatpush2.bf16.msra.mxu0 0
    %1715 = vmatprep.subr.bf16.mxu0 0
    %1716 = vmatpush2.bf16.msra.mxu0 0
    %1717 = vmatprep.mubr.bf16.mxu0 0
    %1718 = vmatmul.mubr.bf16.gmra.mxu0 %v1683
    %v1719 = vpop.f32.mrf.mxu0
    %v1720 = vadd.f32 0.0, %v1719
    %v1721 = vpop.f32.mrf.mxu0
    %v1722 = vadd.f32 0.0, %v1721
    %v1723 = vpop.f32.mrf.mxu0
    %v1724 = vpop.f32.mrf.mxu0
    %1725 = vdwg.mxu0
    %v1727 = vrot.slane %v1720, 4
    %v1729 = vadd.f32 %v1179, %v1727
    %v1730 = vxor.u32 %v1729, 2147483648
    %v1731 = vmul.f32 %v1730, 1.442695
    %v1732 = vpow.pop %v1731
    %v1733 = vadd.f32 %v1732, 1.0
    %v1734 = vrcp.pop %v1733
    %v1735 = vmul.f32 1.0, %v1734
    %v1736 = vadd.f32 %v1722, %v1191
    %v1738 = vrot.slane %v1736, 4
    %v1740 = vmul.f32 %v1735, %v1738
    %v1741 = vadd.f32 %v1181, %v1740
    %v1742 = vtanh.pop %v1741
    %v1743 = vsub.f32 1.0, %v1735
    %1745 = vrot.lane.b32.xlu0 %v1742, 64
    %v1746 = vpop.permute.xlu0 %1745
    %v1748 = vmul.f32 %v1743, %v1746
    %v1750 = vrot.slane %v1676, 6
    %v1752 = vmul.f32 %v1735, %v1750
    %v1753 = vadd.f32 %v1748, %v1752
    %v1754 = vpack.c.bf16 %v1753, %v1753
    %v1756 = vrot.slane %v1754, 2
    %1757 = vrot.lane.b32.xlu0 %v1756, 64
    %v1758 = vpop.permute.xlu0 %1757
    %v1760 = vsel %vm364, %v1758, 0
    %1762 = vmatprep.subr.bf16.mxu0 0
    %1763 = vmatpush1.bf16.msra.mxu0 0
    %1764 = vmatprep.subr.bf16.mxu0 0
    %1765 = vmatpush1.bf16.msra.mxu0 0
    %1766 = vmatprep.subr.bf16.mxu0 0
    %1767 = vmatpush1.bf16.msra.mxu0 0
    %1768 = vmatprep.subr.bf16.mxu0 0
    %1769 = vmatpush1.bf16.msra.mxu0 0
    %1770 = vmatprep.subr.bf16.mxu0 %v1224
    %1771 = vmatpush1.bf16.msra.mxu0 %v1223
    %1772 = vmatprep.subr.bf16.mxu0 %v1222
    %1773 = vmatpush1.bf16.msra.mxu0 %v1221
    %1774 = vmatprep.subr.bf16.mxu0 %v1220
    %1775 = vmatpush1.bf16.msra.mxu0 %v1219
    %1776 = vmatprep.subr.bf16.mxu0 %v1218
    %1777 = vmatpush1.bf16.msra.mxu0 %v1217
    %1778 = vmatprep.subr.bf16.mxu0 0
    %1779 = vmatpush2.bf16.msra.mxu0 0
    %1780 = vmatprep.subr.bf16.mxu0 0
    %1781 = vmatpush2.bf16.msra.mxu0 0
    %1782 = vmatprep.subr.bf16.mxu0 0
    %1783 = vmatpush2.bf16.msra.mxu0 0
    %1784 = vmatprep.subr.bf16.mxu0 0
    %1785 = vmatpush2.bf16.msra.mxu0 0
    %1786 = vmatprep.subr.bf16.mxu0 0
    %1787 = vmatpush2.bf16.msra.mxu0 0
    %1788 = vmatprep.subr.bf16.mxu0 0
    %1789 = vmatpush2.bf16.msra.mxu0 0
    %1790 = vmatprep.subr.bf16.mxu0 0
    %1791 = vmatpush2.bf16.msra.mxu0 0
    %1792 = vmatprep.subr.bf16.mxu0 0
    %1793 = vmatpush2.bf16.msra.mxu0 0
    %1794 = vmatprep.mubr.bf16.mxu0 0
    %1795 = vmatmul.mubr.bf16.gmra.mxu0 %v1760
    %v1796 = vpop.f32.mrf.mxu0
    %v1797 = vadd.f32 0.0, %v1796
    %v1798 = vpop.f32.mrf.mxu0
    %v1799 = vadd.f32 0.0, %v1798
    %v1800 = vpop.f32.mrf.mxu0
    %v1801 = vpop.f32.mrf.mxu0
    %1802 = vdwg.mxu0
    %v1804 = vrot.slane %v1797, 2
    %v1806 = vadd.f32 %v1179, %v1804
    %v1807 = vxor.u32 %v1806, 2147483648
    %v1808 = vmul.f32 %v1807, 1.442695
    %v1809 = vpow.pop %v1808
    %v1810 = vadd.f32 %v1809, 1.0
    %v1811 = vrcp.pop %v1810
    %v1812 = vmul.f32 1.0, %v1811
    %v1813 = vadd.f32 %v1799, %v1191
    %v1815 = vrot.slane %v1813, 2
    %v1817 = vmul.f32 %v1812, %v1815
    %v1818 = vadd.f32 %v1181, %v1817
    %v1819 = vtanh.pop %v1818
    %v1820 = vsub.f32 1.0, %v1812
    %1822 = vrot.lane.b32.xlu0 %v1819, 64
    %v1823 = vpop.permute.xlu0 %1822
    %v1825 = vmul.f32 %v1820, %v1823
    %v1827 = vrot.slane %v1753, 6
    %v1829 = vmul.f32 %v1812, %v1827
    %v1830 = vadd.f32 %v1825, %v1829
    %v1831 = vsel %vm278, %v1299, %v1375
    %v1832 = vsel %vm199, %v1831, %v1452
    %vm1833 = vcmask 1045504
    %v1834 = vsel %vm1833, %v1832, %v1529
    %v1835 = vsel %vm278, %v1600, %v1676
    %v1836 = vsel %vm199, %v1835, %v1753
    %v1837 = vsel %vm1833, %v1836, %v1830
    %v1838 = vld [vmem:[%s4 + $0x1c8] sm:$0xff]
    %v1839 = vld [vmem:[%s4 + $0x1d0] sm:$0xff]
    %v1840 = vld [vmem:[%s4 + $0x1d8] sm:$0xff]
    %v1841 = vld [vmem:[%s4 + $0x1e0] sm:$0xff]
    %v1842 = vld [vmem:[%s4 + $0x1e8] sm:$0xff]
    %v1843 = vld [vmem:[%s4 + $0x1f0] sm:$0xff]
    %v1844 = vld [vmem:[%s4 + $0x1f8] sm:$0xff]
    %v1845 = vld [vmem:[%s4 + $0x200] sm:$0xff]
    %1848 = vrot.lane.b32.xlu0 %v1834, 64
    %v1849 = vpop.permute.xlu0 %1848
    %1850 = vrot.lane.b32.xlu0 %v1837, 64
    %v1851 = vpop.permute.xlu0 %1850
    %v1852 = vsel %vm364, %v1849, 0
    %v1854 = vsel %vm364, %v1851, 0
    %1856 = vmatprep.subr.mxu0 0.0
    %1857 = vmatpush1.msra.mxu0 0.0
    %1858 = vmatprep.subr.mxu0 0.0
    %1859 = vmatpush1.msra.mxu0 0.0
    %1860 = vmatprep.subr.mxu0 0.0
    %1861 = vmatpush1.msra.mxu0 0.0
    %1862 = vmatprep.subr.mxu0 0.0
    %1863 = vmatpush1.msra.mxu0 0.0
    %1864 = vmatprep.subr.mxu0 0.0
    %1865 = vmatpush1.msra.mxu0 0.0
    %1866 = vmatprep.subr.mxu0 0.0
    %1867 = vmatpush1.msra.mxu0 0.0
    %1868 = vmatprep.subr.mxu0 0.0
    %1869 = vmatpush1.msra.mxu0 0.0
    %1870 = vmatprep.subr.mxu0 0.0
    %1871 = vmatpush1.msra.mxu0 0.0
    %1872 = vmatprep.subr.mxu0 0.0
    %1873 = vmatpush1.msra.mxu0 %v1845
    %1874 = vmatprep.subr.mxu0 0.0
    %1875 = vmatpush1.msra.mxu0 %v1844
    %1876 = vmatprep.subr.mxu0 0.0
    %1877 = vmatpush1.msra.mxu0 %v1843
    %1878 = vmatprep.subr.mxu0 0.0
    %1879 = vmatpush1.msra.mxu0 %v1842
    %1880 = vmatprep.subr.mxu0 0.0
    %1881 = vmatpush1.msra.mxu0 %v1841
    %1882 = vmatprep.subr.mxu0 0.0
    %1883 = vmatpush1.msra.mxu0 %v1840
    %1884 = vmatprep.subr.mxu0 0.0
    %1885 = vmatpush1.msra.mxu0 %v1839
    %1886 = vmatprep.subr.mxu0 0.0
    %1887 = vmatpush1.msra.mxu0 %v1838
    %1888 = vmatprep.subr.mxu0 0.0
    %1889 = vmatpush2.msra.mxu0 0.0
    %1890 = vmatprep.subr.mxu0 0.0
    %1891 = vmatpush2.msra.mxu0 0.0
    %1892 = vmatprep.subr.mxu0 0.0
    %1893 = vmatpush2.msra.mxu0 0.0
    %1894 = vmatprep.subr.mxu0 0.0
    %1895 = vmatpush2.msra.mxu0 0.0
    %1896 = vmatprep.subr.mxu0 0.0
    %1897 = vmatpush2.msra.mxu0 0.0
    %1898 = vmatprep.subr.mxu0 0.0
    %1899 = vmatpush2.msra.mxu0 0.0
    %1900 = vmatprep.subr.mxu0 0.0
    %1901 = vmatpush2.msra.mxu0 0.0
    %1902 = vmatprep.subr.mxu0 0.0
    %1903 = vmatpush2.msra.mxu0 0.0
    %1904 = vmatprep.subr.mxu0 0.0
    %1905 = vmatpush2.msra.mxu0 0.0
    %1906 = vmatprep.subr.mxu0 0.0
    %1907 = vmatpush2.msra.mxu0 0.0
    %1908 = vmatprep.subr.mxu0 0.0
    %1909 = vmatpush2.msra.mxu0 0.0
    %1910 = vmatprep.subr.mxu0 0.0
    %1911 = vmatpush2.msra.mxu0 0.0
    %1912 = vmatprep.subr.mxu0 0.0
    %1913 = vmatpush2.msra.mxu0 0.0
    %1914 = vmatprep.subr.mxu0 0.0
    %1915 = vmatpush2.msra.mxu0 0.0
    %1916 = vmatprep.subr.mxu0 0.0
    %1917 = vmatpush2.msra.mxu0 0.0
    %1918 = vmatprep.subr.mxu0 0.0
    %1919 = vmatpush2.msra.mxu0 0.0
    %1920 = vmatprep.mubr.f32.mxu0 0.0
    %1921 = vmatmul.mubr.f32.gmra.mxu0 %v1852
    %v1922 = vpop.f32.mrf.mxu0
    %v1923 = vadd.f32 0.0, %v1922
    %v1924 = vpop.f32.mrf.mxu0
    %1925 = vmatprep.mubr.f32.mxu0 0.0
    %1926 = vmatmul.mubr.f32.gmra.mxu0 %v1854
    %v1927 = vpop.f32.mrf.mxu0
    %v1928 = vadd.f32 0.0, %v1927
    %v1929 = vpop.f32.mrf.mxu0
    %1930 = vdwg.mxu0
    %v1931 = vld [vmem:[%s4 + $0x208] sm:$0xff]
    %v1932 = vld [vmem:[%s4 + $0x210] sm:$0xff]
    %v1933 = vld [vmem:[%s4 + $0x218] sm:$0xff]
    %v1934 = vld [vmem:[%s4 + $0x220] sm:$0xff]
    %v1935 = vld [vmem:[%s4 + $0x228] sm:$0xff]
    %v1936 = vld [vmem:[%s4 + $0x230] sm:$0xff]
    %v1937 = vld [vmem:[%s4 + $0x238] sm:$0xff]
    %v1938 = vld [vmem:[%s4 + $0x240] sm:$0xff]
    %v1939 = vld [vmem:[%s5 + $0x13] ss:$0 sm:$0xff]
    %1940 = vmatprep.subr.mxu0 0.0
    %1941 = vmatpush1.msra.mxu0 0.0
    %1942 = vmatprep.subr.mxu0 0.0
    %1943 = vmatpush1.msra.mxu0 0.0
    %1944 = vmatprep.subr.mxu0 0.0
    %1945 = vmatpush1.msra.mxu0 0.0
    %1946 = vmatprep.subr.mxu0 0.0
    %1947 = vmatpush1.msra.mxu0 0.0
    %1948 = vmatprep.subr.mxu0 0.0
    %1949 = vmatpush1.msra.mxu0 0.0
    %1950 = vmatprep.subr.mxu0 0.0
    %1951 = vmatpush1.msra.mxu0 0.0
    %1952 = vmatprep.subr.mxu0 0.0
    %1953 = vmatpush1.msra.mxu0 0.0
    %1954 = vmatprep.subr.mxu0 0.0
    %1955 = vmatpush1.msra.mxu0 0.0
    %1956 = vmatprep.subr.mxu0 0.0
    %1957 = vmatpush1.msra.mxu0 %v1938
    %1958 = vmatprep.subr.mxu0 0.0
    %1959 = vmatpush1.msra.mxu0 %v1937
    %1960 = vmatprep.subr.mxu0 0.0
    %1961 = vmatpush1.msra.mxu0 %v1936
    %1962 = vmatprep.subr.mxu0 0.0
    %1963 = vmatpush1.msra.mxu0 %v1935
    %1964 = vmatprep.subr.mxu0 0.0
    %1965 = vmatpush1.msra.mxu0 %v1934
    %1966 = vmatprep.subr.mxu0 0.0
    %1967 = vmatpush1.msra.mxu0 %v1933
    %1968 = vmatprep.subr.mxu0 0.0
    %1969 = vmatpush1.msra.mxu0 %v1932
    %1970 = vmatprep.subr.mxu0 0.0
    %1971 = vmatpush1.msra.mxu0 %v1931
    %1972 = vmatprep.subr.mxu0 0.0
    %1973 = vmatpush2.msra.mxu0 0.0
    %1974 = vmatprep.subr.mxu0 0.0
    %1975 = vmatpush2.msra.mxu0 0.0
    %1976 = vmatprep.subr.mxu0 0.0
    %1977 = vmatpush2.msra.mxu0 0.0
    %1978 = vmatprep.subr.mxu0 0.0
    %1979 = vmatpush2.msra.mxu0 0.0
    %1980 = vmatprep.subr.mxu0 0.0
    %1981 = vmatpush2.msra.mxu0 0.0
    %1982 = vmatprep.subr.mxu0 0.0
    %1983 = vmatpush2.msra.mxu0 0.0
    %1984 = vmatprep.subr.mxu0 0.0
    %1985 = vmatpush2.msra.mxu0 0.0
    %1986 = vmatprep.subr.mxu0 0.0
    %1987 = vmatpush2.msra.mxu0 0.0
    %1988 = vmatprep.subr.mxu0 0.0
    %1989 = vmatpush2.msra.mxu0 0.0
    %1990 = vmatprep.subr.mxu0 0.0
    %1991 = vmatpush2.msra.mxu0 0.0
    %1992 = vmatprep.subr.mxu0 0.0
    %1993 = vmatpush2.msra.mxu0 0.0
    %1994 = vmatprep.subr.mxu0 0.0
    %1995 = vmatpush2.msra.mxu0 0.0
    %1996 = vmatprep.subr.mxu0 0.0
    %1997 = vmatpush2.msra.mxu0 0.0
    %1998 = vmatprep.subr.mxu0 0.0
    %1999 = vmatpush2.msra.mxu0 0.0
    %2000 = vmatprep.subr.mxu0 0.0
    %2001 = vmatpush2.msra.mxu0 0.0
    %2002 = vmatprep.subr.mxu0 0.0
    %2003 = vmatpush2.msra.mxu0 0.0
    %2004 = vmatprep.mubr.f32.mxu0 0.0
    %2005 = vmatmul.mubr.f32.gmra.mxu0 %v694
    %v2006 = vpop.f32.mrf.mxu0
    %v2007 = vadd.f32 %v1939, %v2006
    %v2008 = vpop.f32.mrf.mxu0
    %2009 = vdwg.mxu0
    %v2010 = vadd.f32 %v1923, 0.0
    %v2011 = vadd.f32 %v2010, %v2007
    %v2013 = vrot.slane %v1923, 2
    %v2015 = vadd.f32 %v2011, %v2013
    %v2016 = vadd.f32 %v2015, %v2007
    %v2017 = vrot.slane %v1923, 4
    %v2019 = vadd.f32 %v2016, %v2017
    %v2020 = vadd.f32 %v2019, %v2007
    %v2021 = vrot.slane %v1923, 6
    %v2023 = vadd.f32 %v2020, %v2021
    %v2024 = vadd.f32 %v2023, %v2007
    %v2025 = vadd.f32 %v2024, %v1928
    %v2026 = vadd.f32 %v2025, %v2007
    %v2028 = vrot.slane %v1928, 2
    %v2030 = vadd.f32 %v2026, %v2028
    %v2031 = vadd.f32 %v2030, %v2007
    %v2032 = vrot.slane %v1928, 4
    %v2034 = vadd.f32 %v2031, %v2032
    %v2035 = vadd.f32 %v2034, %v2007
    %v2036 = vrot.slane %v1928, 6
    %v2038 = vadd.f32 %v2035, %v2036
    %v2039 = vadd.f32 %v2038, %v2007
    %2041 = vrot.lane.b32.xlu0 %v2016, 2
    %v2042 = vpop.permute.xlu0 %2041
    %2045 = vrot.lane.b32.xlu0 %v2020, 4
    %v2046 = vpop.permute.xlu0 %2045
    %2049 = vrot.lane.b32.xlu0 %v2024, 6
    %v2050 = vpop.permute.xlu0 %2049
    %2053 = vrot.lane.b32.xlu0 %v2026, 8
    %v2054 = vpop.permute.xlu0 %2053
    %2057 = vrot.lane.b32.xlu0 %v2031, 10
    %v2058 = vpop.permute.xlu0 %2057
    %2061 = vrot.lane.b32.xlu0 %v2035, 12
    %v2062 = vpop.permute.xlu0 %2061
    %2065 = vrot.lane.b32.xlu0 %v2039, 14
    %v2066 = vpop.permute.xlu0 %2065
    %v2068 = vsel %vm601, %v2011, %v2042
    %v2069 = vsel %vm195, %v2068, %v2046
    %vm2070 = vcmask 48128
    %v2071 = vsel %vm2070, %v2069, %v2050
    %vm2072 = vcmask 64512
    %v2073 = vsel %vm2072, %v2071, %v2054
    %vm2074 = vcmask 80896
    %v2075 = vsel %vm2074, %v2073, %v2058
    %vm2076 = vcmask 97280
    %v2077 = vsel %vm2076, %v2075, %v2062
    %vm2078 = vcmask 113664
    %v2079 = vsel %vm2078, %v2077, %v2066
    %vm2080 = vcmask 123904
    %2081 = vst.msk [vmem:[#allocation2] sm:$0x3] %vm2080, %v2079
    // Predicated region
    $region26: #{tpu_custom_call.1} parent=1 // pred_check
      _
    $region27: #{tpu_custom_call.1} parent=1 // pred_check_branch
      %2083 = sbr.rel (0) target = $region29
    $region28: #{tpu_custom_call.1} parent=1 // pred_region
      %s2085 = ssub.s32 32, 32
      %2086 = vsyncadd [#allocation3], %s2085
      %s2088 = sshll.u32 [#allocation2], 4
      %s2089 = int_to_ptr.vmem [resolvable:$true] %s2088
      %2091 = dma.vmem_to_hbm [thread:$0]  %s2089, 32, %s6, [#allocation3]
    $region29: #{tpu_custom_call.1} parent=1 // pred_fallthru
      _
    // Predicated region
    $region30: #{tpu_custom_call.1} parent=1 // pred_check
      _
    $region31: #{tpu_custom_call.1} parent=1 // pred_check_branch
      %2093 = sbr.rel (0) target = $region33
    $region32: #{tpu_custom_call.1} parent=1 // pred_region
      %2094 = dma.done [#allocation3], 32
    $region33: #{tpu_custom_call.1} parent=1 // pred_fallthru
      _
    %2095 = vsyncpa [#allocation3], 1

</llo_original>
